<compile_context>
chip_gen: v7x
topology: tpu7x:2x2x1
jax: 0.10.0
libtpu: 0.0.40
codegen_flags: <defaults>
</compile_context>

<pallas_src>
import functools
import warnings

import jax
import jax.numpy as jnp
from jax.experimental import pallas as pl
from jax.experimental.pallas import tpu as pltpu


def _kl_full_gaussian_kernel(p_mu_ref, p_cov_ref, q_mu_ref, q_cov_ref,
                             out_ref, *, eps, k):
    f32 = jnp.float32
    p_mu = p_mu_ref[...].astype(f32)        # (k, bb)   rows = K, lanes = batch
    q_mu = q_mu_ref[...].astype(f32)        # (k, bb)
    p_cov = p_cov_ref[...].astype(f32)      # (k, k, bb)
    q_cov = q_cov_ref[...].astype(f32)      # (k, k, bb)
    bb = p_cov.shape[-1]

    # Identity with (row, col) on the (leading, sublane) axes, broadcast over
    # the batch lanes. Built from a sublane-axis iota only (safe lowering).
    col_ids = jax.lax.broadcasted_iota(jnp.int32, (1, k, 1), 1)
    eye = jnp.concatenate([(col_ids == r).astype(f32) for r in range(k)],
                          axis=0)                                   # (k, k, 1)

    P = p_cov + eps * eye                   # (k, k, bb)
    Q = q_cov + eps * eye

    def recip(x):
        # EUP approximate reciprocal + one Newton step (~f32 accurate); keeps
        # the divide off the VALU-bound elimination chain.
        r = pl.reciprocal(x, approx=True)
        return r * (2.0 - x * r)

    # ---- Gauss-Jordan inverse of Q, recording pivots for logdet(Q). ----
    # Select-free rank-1 updates: with col_a' = A[:, i] - e_i the i-th entry of
    # the update column becomes (pivot - 1), so
    #   inv <- inv - col_a' * row_inv      and      A <- A - col_a' * row_a
    # reproduce both the pivot-row scaling and the elimination of every other
    # row with no per-element select.
    # Unrolled over k: fine for small K.
    # TODO(synk): for K >= ~16 switch to a lax.fori_loop body holding A/inv in
    # pltpu.VMEM scratch (pl.ds row slices) to bound live ranges / program size.
    inv = jnp.broadcast_to(eye, (k, k, bb))
    A = Q
    q_pivots = []
    for i in range(k):
        pivot = A[i, i:i + 1, :]                            # (1, bb)
        q_pivots.append(pivot)
        inv_piv = recip(pivot)                              # (1, bb)
        row_inv = inv[i] * inv_piv                          # (k, bb)
        col_a = A[:, i:i + 1, :] - eye[:, i:i + 1, :]       # (k, 1, bb)
        inv = inv - col_a * row_inv[None, :, :]
        if i + 1 < k:                                       # A unused after last step
            row_a = A[i] * inv_piv                          # (k, bb)
            A = A - col_a * row_a[None, :, :]
    # One batched log, off the sequential elimination chain.
    logdet_q = jnp.sum(jnp.log(jnp.concatenate(q_pivots, axis=0)),
                       axis=0, keepdims=True)               # (1, bb)

    # ---- logdet(P) only: forward elimination, no inverse tracked. ----
    # Processed rows are dropped each step (static leading-axis slices), so the
    # update only touches the rows that still matter.
    Ap = P                                                  # rows i..k-1 live
    p_pivots = []
    for i in range(k):
        pivot = Ap[0, i:i + 1, :]                           # (1, bb) == A[i, i]
        p_pivots.append(pivot)
        if i + 1 < k:
            row_a = Ap[0] * recip(pivot)                    # (k, bb)
            rest = Ap[1:]                                   # (k-i-1, k, bb)
            col = rest[:, i:i + 1, :]                       # (k-i-1, 1, bb)
            Ap = rest - col * row_a[None, :, :]
    logdet_p = jnp.sum(jnp.log(jnp.concatenate(p_pivots, axis=0)),
                       axis=0, keepdims=True)               # (1, bb)

    # trace(Q^-1 P) + diff^T Q^-1 diff fused into a single reduction.
    # Uses symmetry of P (covariance + eps*I): trace(Q^-1 P) == sum(Q^-1 * P).
    diff = q_mu - p_mu                                      # (k, bb)
    m = P + diff[:, None, :] * diff[None, :, :]             # (k, k, bb)
    tr_maha = jnp.sum(jnp.sum(inv * m, axis=0), axis=0, keepdims=True)  # (1, bb)

    kl = 0.5 * (tr_maha + logdet_q - logdet_p - float(k))
    out_ref[...] = kl.astype(out_ref.dtype)


def _vmem_limit_bytes():
    # v5e/v6e have 128 MiB of physical VMEM per TensorCore, v7x has 64 MiB.
    # Ask for 64 MiB of scoped VMEM only on the 128-MiB parts; otherwise (v7x
    # or unknown) cap at 48 MiB so Mosaic internal scratch and the
    # double-buffered input tiles still have headroom.
    try:
        phys = int(pltpu.get_tpu_info().vmem_capacity_bytes)
    except Exception:
        phys = 0
    if phys >= 100 * 1024 * 1024:
        return 64 * 1024 * 1024
    return 48 * 1024 * 1024


def _choose_block_b(B, K, block_b=None):
    """Pick a lane-dense (multiple-of-128) batch block size."""
    if block_b is not None:
        assert block_b % 128 == 0, "block_b must be a multiple of 128"
        return block_b
    # Large blocks amortize the ~0.35us/step grid overhead (v5e/v6e); the caps
    # keep the double-buffered cov inputs plus ~8 live (K,K,bb) f32 temps well
    # inside scoped VMEM on every generation and bound the unrolled live set.
    if K <= 8:
        cap = 2048
    elif K <= 16:
        cap = 1024
    else:
        # TODO(synk): with the fori_loop/VMEM-scratch elimination this could
        # grow again; the fully unrolled form spills badly at large K * bb.
        cap = 256
    # On large batches keep >= 4 grid steps so v7x's two TensorCores each get a
    # pipelined stream of blocks, but never drop below 1024 lanes/block.
    if B >= 4 * 1024:
        cap = min(cap, max(1024, (B // 4) // 128 * 128))
    return min(cap, pl.cdiv(B, 128) * 128)


def kl_div_full_gaussian(p_mu, p_cov, q_mu, q_cov, eps=1e-3, nan_to_num=-1,
                         block_b=None, check_nan=False, batch_last=False,
                         allow_input_fusion=False):
    if batch_last:
        # Producer already supplies the kernel-native layout: mus (K, B),
        # covariances (K, K, B). This skips the HBM repack below entirely and
        # is the recommended production path.
        p_mu_t, q_mu_t, p_cov_t, q_cov_t = p_mu, q_mu, p_cov, q_cov
        K, B = p_mu_t.shape
        assert p_cov_t.shape == (K, K, B) and q_mu_t.shape == (K, B)
        assert q_cov_t.shape == (K, K, B)
    else:
        B, K = p_mu.shape
        assert p_cov.shape == (B, K, K) and q_mu.shape == (B, K)
        assert q_cov.shape == (B, K, K)
        # NOTE: this repack is a full HBM read+write of every covariance; for a
        # memory-light kernel it can dominate wall clock. Prefer batch_last=True
        # (producer emits (K, K, B)/(K, B)), or try allow_input_fusion=True to
        # let XLA fuse the transpose into the pallas operands.
        p_mu_t = jnp.transpose(p_mu, (1, 0))          # (K, B)
        q_mu_t = jnp.transpose(q_mu, (1, 0))
        p_cov_t = jnp.transpose(p_cov, (1, 2, 0))     # (K, K, B)
        q_cov_t = jnp.transpose(q_cov, (1, 2, 0))

    out_dtype = p_mu.dtype

    bb = _choose_block_b(B, K, block_b)
    B_pad = pl.cdiv(B, bb) * bb
    if B_pad != B:
        # Zero-pad the batch lanes: padded entries see P = Q = eps*I, whose KL
        # is exactly 0 (no NaNs), and they are sliced away below. Keeps every
        # tile lane-dense (unmasked vst) and the grid well-formed for any B.
        pad = B_pad - B
        p_mu_t = jnp.pad(p_mu_t, ((0, 0), (0, pad)))
        q_mu_t = jnp.pad(q_mu_t, ((0, 0), (0, pad)))
        p_cov_t = jnp.pad(p_cov_t, ((0, 0), (0, 0), (0, pad)))
        q_cov_t = jnp.pad(q_cov_t, ((0, 0), (0, 0), (0, pad)))

    grid = (B_pad // bb,)
    kern = functools.partial(_kl_full_gaussian_kernel, eps=float(eps), k=K)
    out = pl.pallas_call(
        kern,
        out_shape=jax.ShapeDtypeStruct((1, B_pad), jnp.float32),  # lane-dense row
        grid=grid,
        in_specs=[
            pl.BlockSpec((K, bb), lambda i: (0, i)),
            pl.BlockSpec((K, K, bb), lambda i: (0, 0, i)),
            pl.BlockSpec((K, bb), lambda i: (0, i)),
            pl.BlockSpec((K, K, bb), lambda i: (0, 0, i)),
        ],
        out_specs=pl.BlockSpec((1, bb), lambda i: (0, i)),
        compiler_params=pltpu.CompilerParams(
            dimension_semantics=("parallel",),
            vmem_limit_bytes=_vmem_limit_bytes(),
            allow_input_fusion=[True, True, True, True] if allow_input_fusion
            else None),
    )(p_mu_t, p_cov_t, q_mu_t, q_cov_t)

    kl = out[0, :B]                               # (B,)
    if nan_to_num >= 0:
        kl = jnp.nan_to_num(kl, nan=float(nan_to_num))
    if check_nan and bool(jnp.any(jnp.isnan(kl))):
        # Matches the module's warning (checked after nan_to_num, like the
        # reference). Opt-in: the host sync would otherwise serialize dispatch.
        warnings.warn("NaN encountered")
    return kl.astype(out_dtype)


def _reference_kl(p_mu, p_cov, q_mu, q_cov, eps):
    K = p_mu.shape[-1]
    eye = jnp.eye(K, dtype=jnp.float32)
    P = p_cov + eps * eye
    Q = q_cov + eps * eye
    Qi = jnp.linalg.inv(Q)
    diff = q_mu - p_mu
    tr = jnp.trace(Qi @ P, axis1=-2, axis2=-1)
    maha = jnp.einsum("bi,bij,bj->b", diff, Qi, diff)
    _, ld_q = jnp.linalg.slogdet(Q)
    _, ld_p = jnp.linalg.slogdet(P)
    return 0.5 * (tr + maha + ld_q - ld_p - K)


if __name__ == "__main__":
    B, K = 8, 8
    key = jax.random.PRNGKey(0)
    k1, k2, k3, k4 = jax.random.split(key, 4)
    p_mu = jax.random.normal(k1, (B, K), jnp.float32)
    q_mu = jax.random.normal(k2, (B, K), jnp.float32)
    a_p = jax.random.normal(k3, (B, K, K), jnp.float32)
    a_q = jax.random.normal(k4, (B, K, K), jnp.float32)
    eye = jnp.eye(K, dtype=jnp.float32)
    # SPD covariance-like inputs (what the module expects).
    p_cov = a_p @ jnp.swapaxes(a_p, -1, -2) / K + 0.5 * eye
    q_cov = a_q @ jnp.swapaxes(a_q, -1, -2) / K + 0.5 * eye

    kl = kl_div_full_gaussian(p_mu, p_cov, q_mu, q_cov, eps=1e-3, nan_to_num=-1)
    jax.block_until_ready(kl)

    kl_ref = _reference_kl(p_mu, p_cov, q_mu, q_cov, eps=1e-3)
    assert kl.shape == (B,)
    assert jnp.allclose(kl, kl_ref, rtol=1e-3, atol=1e-3), (kl, kl_ref)
    print("KERNEL_OK")
</pallas_src>

<mosaic_0001>
module attributes {stable_mosaic.version = 11 : i64} {
  func.func @_kl_full_gaussian_kernel(%arg0: i32, %arg1: memref<8x128xf32, #tpu.memory_space<vmem>>, %arg2: memref<8x8x128xf32, #tpu.memory_space<vmem>>, %arg3: memref<8x128xf32, #tpu.memory_space<vmem>>, %arg4: memref<8x8x128xf32, #tpu.memory_space<vmem>>, %arg5: memref<1x128xf32, #tpu.memory_space<vmem>>) attributes {dimension_semantics = [#tpu.dimension_semantics<parallel>], iteration_bounds = array<i64: 1>, scalar_prefetch = 0 : i64, scratch_operands = 0 : i64, tpu.core_type = #tpu.core_type<tc>, window_params = [{transform_indices = @transform_0, window_bounds = array<i64: 8, 128>}, {transform_indices = @transform_1, window_bounds = array<i64: 8, 8, 128>}, {transform_indices = @transform_2, window_bounds = array<i64: 8, 128>}, {transform_indices = @transform_3, window_bounds = array<i64: 8, 8, 128>}, {transform_indices = @transform_4, window_bounds = array<i64: 1, 128>}]} {
    %c0 = arith.constant 0 : index
    %c0_0 = arith.constant 0 : index
    %0 = vector.load %arg1[%c0, %c0_0] : memref<8x128xf32, #tpu.memory_space<vmem>>, vector<8x128xf32>
    %c0_1 = arith.constant 0 : index
    %c0_2 = arith.constant 0 : index
    %1 = vector.load %arg3[%c0_1, %c0_2] : memref<8x128xf32, #tpu.memory_space<vmem>>, vector<8x128xf32>
    %c0_3 = arith.constant 0 : index
    %c0_4 = arith.constant 0 : index
    %c0_5 = arith.constant 0 : index
    %2 = vector.load %arg2[%c0_3, %c0_4, %c0_5] : memref<8x8x128xf32, #tpu.memory_space<vmem>>, vector<8x8x128xf32>
    %c0_6 = arith.constant 0 : index
    %c0_7 = arith.constant 0 : index
    %c0_8 = arith.constant 0 : index
    %3 = vector.load %arg4[%c0_6, %c0_7, %c0_8] : memref<8x8x128xf32, #tpu.memory_space<vmem>>, vector<8x8x128xf32>
    %4 = tpu.iota {dimensions = array<i32: 1>} : vector<1x8x1xi32>
    %c0_i32 = arith.constant 0 : i32
    %5 = vector.broadcast %c0_i32 : i32 to vector<1x8x1xi32>
    %6 = arith.cmpi eq, %4, %5 : vector<1x8x1xi32>
    %7 = arith.extui %6 : vector<1x8x1xi1> to vector<1x8x1xi32>
    %8 = arith.sitofp %7 : vector<1x8x1xi32> to vector<1x8x1xf32>
    %c1_i32 = arith.constant 1 : i32
    %9 = vector.broadcast %c1_i32 : i32 to vector<1x8x1xi32>
    %10 = arith.cmpi eq, %4, %9 : vector<1x8x1xi32>
    %11 = arith.extui %10 : vector<1x8x1xi1> to vector<1x8x1xi32>
    %12 = arith.sitofp %11 : vector<1x8x1xi32> to vector<1x8x1xf32>
    %c2_i32 = arith.constant 2 : i32
    %13 = vector.broadcast %c2_i32 : i32 to vector<1x8x1xi32>
    %14 = arith.cmpi eq, %4, %13 : vector<1x8x1xi32>
    %15 = arith.extui %14 : vector<1x8x1xi1> to vector<1x8x1xi32>
    %16 = arith.sitofp %15 : vector<1x8x1xi32> to vector<1x8x1xf32>
    %c3_i32 = arith.constant 3 : i32
    %17 = vector.broadcast %c3_i32 : i32 to vector<1x8x1xi32>
    %18 = arith.cmpi eq, %4, %17 : vector<1x8x1xi32>
    %19 = arith.extui %18 : vector<1x8x1xi1> to vector<1x8x1xi32>
    %20 = arith.sitofp %19 : vector<1x8x1xi32> to vector<1x8x1xf32>
    %c4_i32 = arith.constant 4 : i32
    %21 = vector.broadcast %c4_i32 : i32 to vector<1x8x1xi32>
    %22 = arith.cmpi eq, %4, %21 : vector<1x8x1xi32>
    %23 = arith.extui %22 : vector<1x8x1xi1> to vector<1x8x1xi32>
    %24 = arith.sitofp %23 : vector<1x8x1xi32> to vector<1x8x1xf32>
    %c5_i32 = arith.constant 5 : i32
    %25 = vector.broadcast %c5_i32 : i32 to vector<1x8x1xi32>
    %26 = arith.cmpi eq, %4, %25 : vector<1x8x1xi32>
    %27 = arith.extui %26 : vector<1x8x1xi1> to vector<1x8x1xi32>
    %28 = arith.sitofp %27 : vector<1x8x1xi32> to vector<1x8x1xf32>
    %c6_i32 = arith.constant 6 : i32
    %29 = vector.broadcast %c6_i32 : i32 to vector<1x8x1xi32>
    %30 = arith.cmpi eq, %4, %29 : vector<1x8x1xi32>
    %31 = arith.extui %30 : vector<1x8x1xi1> to vector<1x8x1xi32>
    %32 = arith.sitofp %31 : vector<1x8x1xi32> to vector<1x8x1xf32>
    %c7_i32 = arith.constant 7 : i32
    %33 = vector.broadcast %c7_i32 : i32 to vector<1x8x1xi32>
    %34 = arith.cmpi eq, %4, %33 : vector<1x8x1xi32>
    %35 = arith.extui %34 : vector<1x8x1xi1> to vector<1x8x1xi32>
    %36 = arith.sitofp %35 : vector<1x8x1xi32> to vector<1x8x1xf32>
    %37 = tpu.concatenate %8, %12, %16, %20, %24, %28, %32, %36 in 0 : vector<1x8x1xf32>, vector<1x8x1xf32>, vector<1x8x1xf32>, vector<1x8x1xf32>, vector<1x8x1xf32>, vector<1x8x1xf32>, vector<1x8x1xf32>, vector<1x8x1xf32> -> vector<8x8x1xf32>
    %cst = arith.constant 1.000000e-03 : f32
    %38 = vector.broadcast %cst : f32 to vector<8x8x1xf32>
    %39 = arith.mulf %38, %37 : vector<8x8x1xf32>
    %40 = vector.broadcast %39 : vector<8x8x1xf32> to vector<8x8x128xf32>
    %41 = arith.addf %2, %40 : vector<8x8x128xf32>
    %cst_9 = arith.constant 1.000000e-03 : f32
    %42 = vector.broadcast %cst_9 : f32 to vector<8x8x1xf32>
    %43 = arith.mulf %42, %37 : vector<8x8x1xf32>
    %44 = vector.broadcast %43 : vector<8x8x1xf32> to vector<8x8x128xf32>
    %45 = arith.addf %3, %44 : vector<8x8x128xf32>
    %46 = vector.shape_cast %37 : vector<8x8x1xf32> to vector<8x8x1xf32>
    %47 = vector.broadcast %46 : vector<8x8x1xf32> to vector<8x8x128xf32>
    %48 = vector.extract_strided_slice %45 {offsets = [0, 0, 0], sizes = [1, 1, 128], strides = [1, 1, 1]} : vector<8x8x128xf32> to vector<1x1x128xf32>
    %49 = vector.shape_cast %48 : vector<1x1x128xf32> to vector<1x128xf32>
    %50 = tpu.reciprocal %49 {approx = true} : vector<1x128xf32> -> vector<1x128xf32>
    %51 = arith.mulf %49, %50 : vector<1x128xf32>
    %cst_10 = arith.constant 2.000000e+00 : f32
    %52 = vector.broadcast %cst_10 : f32 to vector<1x128xf32>
    %53 = arith.subf %52, %51 : vector<1x128xf32>
    %54 = arith.mulf %50, %53 : vector<1x128xf32>
    %55 = vector.extract_strided_slice %47 {offsets = [0, 0, 0], sizes = [1, 8, 128], strides = [1, 1, 1]} : vector<8x8x128xf32> to vector<1x8x128xf32>
    %56 = vector.shape_cast %55 : vector<1x8x128xf32> to vector<8x128xf32>
    %57 = vector.broadcast %54 : vector<1x128xf32> to vector<8x128xf32>
    %58 = arith.mulf %56, %57 : vector<8x128xf32>
    %59 = vector.extract_strided_slice %45 {offsets = [0, 0, 0], sizes = [8, 1, 128], strides = [1, 1, 1]} : vector<8x8x128xf32> to vector<8x1x128xf32>
    %60 = vector.extract_strided_slice %37 {offsets = [0, 0, 0], sizes = [8, 1, 1], strides = [1, 1, 1]} : vector<8x8x1xf32> to vector<8x1x1xf32>
    %61 = vector.broadcast %60 : vector<8x1x1xf32> to vector<8x1x128xf32>
    %62 = arith.subf %59, %61 : vector<8x1x128xf32>
    %63 = vector.shape_cast %58 : vector<8x128xf32> to vector<1x8x128xf32>
    %64 = vector.broadcast %62 : vector<8x1x128xf32> to vector<8x8x128xf32>
    %65 = vector.broadcast %63 : vector<1x8x128xf32> to vector<8x8x128xf32>
    %66 = arith.mulf %64, %65 : vector<8x8x128xf32>
    %67 = arith.subf %47, %66 : vector<8x8x128xf32>
    %68 = vector.extract_strided_slice %45 {offsets = [0, 0, 0], sizes = [1, 8, 128], strides = [1, 1, 1]} : vector<8x8x128xf32> to vector<1x8x128xf32>
    %69 = vector.shape_cast %68 : vector<1x8x128xf32> to vector<8x128xf32>
    %70 = vector.broadcast %54 : vector<1x128xf32> to vector<8x128xf32>
    %71 = arith.mulf %69, %70 : vector<8x128xf32>
    %72 = vector.shape_cast %71 : vector<8x128xf32> to vector<1x8x128xf32>
    %73 = vector.broadcast %62 : vector<8x1x128xf32> to vector<8x8x128xf32>
    %74 = vector.broadcast %72 : vector<1x8x128xf32> to vector<8x8x128xf32>
    %75 = arith.mulf %73, %74 : vector<8x8x128xf32>
    %76 = arith.subf %45, %75 : vector<8x8x128xf32>
    %77 = vector.extract_strided_slice %76 {offsets = [1, 1, 0], sizes = [1, 1, 128], strides = [1, 1, 1]} : vector<8x8x128xf32> to vector<1x1x128xf32>
    %78 = vector.shape_cast %77 : vector<1x1x128xf32> to vector<1x128xf32>
    %79 = tpu.reciprocal %78 {approx = true} : vector<1x128xf32> -> vector<1x128xf32>
    %80 = arith.mulf %78, %79 : vector<1x128xf32>
    %cst_11 = arith.constant 2.000000e+00 : f32
    %81 = vector.broadcast %cst_11 : f32 to vector<1x128xf32>
    %82 = arith.subf %81, %80 : vector<1x128xf32>
    %83 = arith.mulf %79, %82 : vector<1x128xf32>
    %84 = vector.extract_strided_slice %67 {offsets = [1, 0, 0], sizes = [1, 8, 128], strides = [1, 1, 1]} : vector<8x8x128xf32> to vector<1x8x128xf32>
    %85 = vector.shape_cast %84 : vector<1x8x128xf32> to vector<8x128xf32>
    %86 = vector.broadcast %83 : vector<1x128xf32> to vector<8x128xf32>
    %87 = arith.mulf %85, %86 : vector<8x128xf32>
    %88 = vector.extract_strided_slice %76 {offsets = [0, 1, 0], sizes = [8, 1, 128], strides = [1, 1, 1]} : vector<8x8x128xf32> to vector<8x1x128xf32>
    %89 = vector.extract_strided_slice %37 {offsets = [0, 1, 0], sizes = [8, 1, 1], strides = [1, 1, 1]} : vector<8x8x1xf32> to vector<8x1x1xf32>
    %90 = vector.broadcast %89 : vector<8x1x1xf32> to vector<8x1x128xf32>
    %91 = arith.subf %88, %90 : vector<8x1x128xf32>
    %92 = vector.shape_cast %87 : vector<8x128xf32> to vector<1x8x128xf32>
    %93 = vector.broadcast %91 : vector<8x1x128xf32> to vector<8x8x128xf32>
    %94 = vector.broadcast %92 : vector<1x8x128xf32> to vector<8x8x128xf32>
    %95 = arith.mulf %93, %94 : vector<8x8x128xf32>
    %96 = arith.subf %67, %95 : vector<8x8x128xf32>
    %97 = vector.extract_strided_slice %76 {offsets = [1, 0, 0], sizes = [1, 8, 128], strides = [1, 1, 1]} : vector<8x8x128xf32> to vector<1x8x128xf32>
    %98 = vector.shape_cast %97 : vector<1x8x128xf32> to vector<8x128xf32>
    %99 = vector.broadcast %83 : vector<1x128xf32> to vector<8x128xf32>
    %100 = arith.mulf %98, %99 : vector<8x128xf32>
    %101 = vector.shape_cast %100 : vector<8x128xf32> to vector<1x8x128xf32>
    %102 = vector.broadcast %91 : vector<8x1x128xf32> to vector<8x8x128xf32>
    %103 = vector.broadcast %101 : vector<1x8x128xf32> to vector<8x8x128xf32>
    %104 = arith.mulf %102, %103 : vector<8x8x128xf32>
    %105 = arith.subf %76, %104 : vector<8x8x128xf32>
    %106 = vector.extract_strided_slice %105 {offsets = [2, 2, 0], sizes = [1, 1, 128], strides = [1, 1, 1]} : vector<8x8x128xf32> to vector<1x1x128xf32>
    %107 = vector.shape_cast %106 : vector<1x1x128xf32> to vector<1x128xf32>
    %108 = tpu.reciprocal %107 {approx = true} : vector<1x128xf32> -> vector<1x128xf32>
    %109 = arith.mulf %107, %108 : vector<1x128xf32>
    %cst_12 = arith.constant 2.000000e+00 : f32
    %110 = vector.broadcast %cst_12 : f32 to vector<1x128xf32>
    %111 = arith.subf %110, %109 : vector<1x128xf32>
    %112 = arith.mulf %108, %111 : vector<1x128xf32>
    %113 = vector.extract_strided_slice %96 {offsets = [2, 0, 0], sizes = [1, 8, 128], strides = [1, 1, 1]} : vector<8x8x128xf32> to vector<1x8x128xf32>
    %114 = vector.shape_cast %113 : vector<1x8x128xf32> to vector<8x128xf32>
    %115 = vector.broadcast %112 : vector<1x128xf32> to vector<8x128xf32>
    %116 = arith.mulf %114, %115 : vector<8x128xf32>
    %117 = vector.extract_strided_slice %105 {offsets = [0, 2, 0], sizes = [8, 1, 128], strides = [1, 1, 1]} : vector<8x8x128xf32> to vector<8x1x128xf32>
    %118 = vector.extract_strided_slice %37 {offsets = [0, 2, 0], sizes = [8, 1, 1], strides = [1, 1, 1]} : vector<8x8x1xf32> to vector<8x1x1xf32>
    %119 = vector.broadcast %118 : vector<8x1x1xf32> to vector<8x1x128xf32>
    %120 = arith.subf %117, %119 : vector<8x1x128xf32>
    %121 = vector.shape_cast %116 : vector<8x128xf32> to vector<1x8x128xf32>
    %122 = vector.broadcast %120 : vector<8x1x128xf32> to vector<8x8x128xf32>
    %123 = vector.broadcast %121 : vector<1x8x128xf32> to vector<8x8x128xf32>
    %124 = arith.mulf %122, %123 : vector<8x8x128xf32>
    %125 = arith.subf %96, %124 : vector<8x8x128xf32>
    %126 = vector.extract_strided_slice %105 {offsets = [2, 0, 0], sizes = [1, 8, 128], strides = [1, 1, 1]} : vector<8x8x128xf32> to vector<1x8x128xf32>
    %127 = vector.shape_cast %126 : vector<1x8x128xf32> to vector<8x128xf32>
    %128 = vector.broadcast %112 : vector<1x128xf32> to vector<8x128xf32>
    %129 = arith.mulf %127, %128 : vector<8x128xf32>
    %130 = vector.shape_cast %129 : vector<8x128xf32> to vector<1x8x128xf32>
    %131 = vector.broadcast %120 : vector<8x1x128xf32> to vector<8x8x128xf32>
    %132 = vector.broadcast %130 : vector<1x8x128xf32> to vector<8x8x128xf32>
    %133 = arith.mulf %131, %132 : vector<8x8x128xf32>
    %134 = arith.subf %105, %133 : vector<8x8x128xf32>
    %135 = vector.extract_strided_slice %134 {offsets = [3, 3, 0], sizes = [1, 1, 128], strides = [1, 1, 1]} : vector<8x8x128xf32> to vector<1x1x128xf32>
    %136 = vector.shape_cast %135 : vector<1x1x128xf32> to vector<1x128xf32>
    %137 = tpu.reciprocal %136 {approx = true} : vector<1x128xf32> -> vector<1x128xf32>
    %138 = arith.mulf %136, %137 : vector<1x128xf32>
    %cst_13 = arith.constant 2.000000e+00 : f32
    %139 = vector.broadcast %cst_13 : f32 to vector<1x128xf32>
    %140 = arith.subf %139, %138 : vector<1x128xf32>
    %141 = arith.mulf %137, %140 : vector<1x128xf32>
    %142 = vector.extract_strided_slice %125 {offsets = [3, 0, 0], sizes = [1, 8, 128], strides = [1, 1, 1]} : vector<8x8x128xf32> to vector<1x8x128xf32>
    %143 = vector.shape_cast %142 : vector<1x8x128xf32> to vector<8x128xf32>
    %144 = vector.broadcast %141 : vector<1x128xf32> to vector<8x128xf32>
    %145 = arith.mulf %143, %144 : vector<8x128xf32>
    %146 = vector.extract_strided_slice %134 {offsets = [0, 3, 0], sizes = [8, 1, 128], strides = [1, 1, 1]} : vector<8x8x128xf32> to vector<8x1x128xf32>
    %147 = vector.extract_strided_slice %37 {offsets = [0, 3, 0], sizes = [8, 1, 1], strides = [1, 1, 1]} : vector<8x8x1xf32> to vector<8x1x1xf32>
    %148 = vector.broadcast %147 : vector<8x1x1xf32> to vector<8x1x128xf32>
    %149 = arith.subf %146, %148 : vector<8x1x128xf32>
    %150 = vector.shape_cast %145 : vector<8x128xf32> to vector<1x8x128xf32>
    %151 = vector.broadcast %149 : vector<8x1x128xf32> to vector<8x8x128xf32>
    %152 = vector.broadcast %150 : vector<1x8x128xf32> to vector<8x8x128xf32>
    %153 = arith.mulf %151, %152 : vector<8x8x128xf32>
    %154 = arith.subf %125, %153 : vector<8x8x128xf32>
    %155 = vector.extract_strided_slice %134 {offsets = [3, 0, 0], sizes = [1, 8, 128], strides = [1, 1, 1]} : vector<8x8x128xf32> to vector<1x8x128xf32>
    %156 = vector.shape_cast %155 : vector<1x8x128xf32> to vector<8x128xf32>
    %157 = vector.broadcast %141 : vector<1x128xf32> to vector<8x128xf32>
    %158 = arith.mulf %156, %157 : vector<8x128xf32>
    %159 = vector.shape_cast %158 : vector<8x128xf32> to vector<1x8x128xf32>
    %160 = vector.broadcast %149 : vector<8x1x128xf32> to vector<8x8x128xf32>
    %161 = vector.broadcast %159 : vector<1x8x128xf32> to vector<8x8x128xf32>
    %162 = arith.mulf %160, %161 : vector<8x8x128xf32>
    %163 = arith.subf %134, %162 : vector<8x8x128xf32>
    %164 = vector.extract_strided_slice %163 {offsets = [4, 4, 0], sizes = [1, 1, 128], strides = [1, 1, 1]} : vector<8x8x128xf32> to vector<1x1x128xf32>
    %165 = vector.shape_cast %164 : vector<1x1x128xf32> to vector<1x128xf32>
    %166 = tpu.reciprocal %165 {approx = true} : vector<1x128xf32> -> vector<1x128xf32>
    %167 = arith.mulf %165, %166 : vector<1x128xf32>
    %cst_14 = arith.constant 2.000000e+00 : f32
    %168 = vector.broadcast %cst_14 : f32 to vector<1x128xf32>
    %169 = arith.subf %168, %167 : vector<1x128xf32>
    %170 = arith.mulf %166, %169 : vector<1x128xf32>
    %171 = vector.extract_strided_slice %154 {offsets = [4, 0, 0], sizes = [1, 8, 128], strides = [1, 1, 1]} : vector<8x8x128xf32> to vector<1x8x128xf32>
    %172 = vector.shape_cast %171 : vector<1x8x128xf32> to vector<8x128xf32>
    %173 = vector.broadcast %170 : vector<1x128xf32> to vector<8x128xf32>
    %174 = arith.mulf %172, %173 : vector<8x128xf32>
    %175 = vector.extract_strided_slice %163 {offsets = [0, 4, 0], sizes = [8, 1, 128], strides = [1, 1, 1]} : vector<8x8x128xf32> to vector<8x1x128xf32>
    %176 = vector.extract_strided_slice %37 {offsets = [0, 4, 0], sizes = [8, 1, 1], strides = [1, 1, 1]} : vector<8x8x1xf32> to vector<8x1x1xf32>
    %177 = vector.broadcast %176 : vector<8x1x1xf32> to vector<8x1x128xf32>
    %178 = arith.subf %175, %177 : vector<8x1x128xf32>
    %179 = vector.shape_cast %174 : vector<8x128xf32> to vector<1x8x128xf32>
    %180 = vector.broadcast %178 : vector<8x1x128xf32> to vector<8x8x128xf32>
    %181 = vector.broadcast %179 : vector<1x8x128xf32> to vector<8x8x128xf32>
    %182 = arith.mulf %180, %181 : vector<8x8x128xf32>
    %183 = arith.subf %154, %182 : vector<8x8x128xf32>
    %184 = vector.extract_strided_slice %163 {offsets = [4, 0, 0], sizes = [1, 8, 128], strides = [1, 1, 1]} : vector<8x8x128xf32> to vector<1x8x128xf32>
    %185 = vector.shape_cast %184 : vector<1x8x128xf32> to vector<8x128xf32>
    %186 = vector.broadcast %170 : vector<1x128xf32> to vector<8x128xf32>
    %187 = arith.mulf %185, %186 : vector<8x128xf32>
    %188 = vector.shape_cast %187 : vector<8x128xf32> to vector<1x8x128xf32>
    %189 = vector.broadcast %178 : vector<8x1x128xf32> to vector<8x8x128xf32>
    %190 = vector.broadcast %188 : vector<1x8x128xf32> to vector<8x8x128xf32>
    %191 = arith.mulf %189, %190 : vector<8x8x128xf32>
    %192 = arith.subf %163, %191 : vector<8x8x128xf32>
    %193 = vector.extract_strided_slice %192 {offsets = [5, 5, 0], sizes = [1, 1, 128], strides = [1, 1, 1]} : vector<8x8x128xf32> to vector<1x1x128xf32>
    %194 = vector.shape_cast %193 : vector<1x1x128xf32> to vector<1x128xf32>
    %195 = tpu.reciprocal %194 {approx = true} : vector<1x128xf32> -> vector<1x128xf32>
    %196 = arith.mulf %194, %195 : vector<1x128xf32>
    %cst_15 = arith.constant 2.000000e+00 : f32
    %197 = vector.broadcast %cst_15 : f32 to vector<1x128xf32>
    %198 = arith.subf %197, %196 : vector<1x128xf32>
    %199 = arith.mulf %195, %198 : vector<1x128xf32>
    %200 = vector.extract_strided_slice %183 {offsets = [5, 0, 0], sizes = [1, 8, 128], strides = [1, 1, 1]} : vector<8x8x128xf32> to vector<1x8x128xf32>
    %201 = vector.shape_cast %200 : vector<1x8x128xf32> to vector<8x128xf32>
    %202 = vector.broadcast %199 : vector<1x128xf32> to vector<8x128xf32>
    %203 = arith.mulf %201, %202 : vector<8x128xf32>
    %204 = vector.extract_strided_slice %192 {offsets = [0, 5, 0], sizes = [8, 1, 128], strides = [1, 1, 1]} : vector<8x8x128xf32> to vector<8x1x128xf32>
    %205 = vector.extract_strided_slice %37 {offsets = [0, 5, 0], sizes = [8, 1, 1], strides = [1, 1, 1]} : vector<8x8x1xf32> to vector<8x1x1xf32>
    %206 = vector.broadcast %205 : vector<8x1x1xf32> to vector<8x1x128xf32>
    %207 = arith.subf %204, %206 : vector<8x1x128xf32>
    %208 = vector.shape_cast %203 : vector<8x128xf32> to vector<1x8x128xf32>
    %209 = vector.broadcast %207 : vector<8x1x128xf32> to vector<8x8x128xf32>
    %210 = vector.broadcast %208 : vector<1x8x128xf32> to vector<8x8x128xf32>
    %211 = arith.mulf %209, %210 : vector<8x8x128xf32>
    %212 = arith.subf %183, %211 : vector<8x8x128xf32>
    %213 = vector.extract_strided_slice %192 {offsets = [5, 0, 0], sizes = [1, 8, 128], strides = [1, 1, 1]} : vector<8x8x128xf32> to vector<1x8x128xf32>
    %214 = vector.shape_cast %213 : vector<1x8x128xf32> to vector<8x128xf32>
    %215 = vector.broadcast %199 : vector<1x128xf32> to vector<8x128xf32>
    %216 = arith.mulf %214, %215 : vector<8x128xf32>
    %217 = vector.shape_cast %216 : vector<8x128xf32> to vector<1x8x128xf32>
    %218 = vector.broadcast %207 : vector<8x1x128xf32> to vector<8x8x128xf32>
    %219 = vector.broadcast %217 : vector<1x8x128xf32> to vector<8x8x128xf32>
    %220 = arith.mulf %218, %219 : vector<8x8x128xf32>
    %221 = arith.subf %192, %220 : vector<8x8x128xf32>
    %222 = vector.extract_strided_slice %221 {offsets = [6, 6, 0], sizes = [1, 1, 128], strides = [1, 1, 1]} : vector<8x8x128xf32> to vector<1x1x128xf32>
    %223 = vector.shape_cast %222 : vector<1x1x128xf32> to vector<1x128xf32>
    %224 = tpu.reciprocal %223 {approx = true} : vector<1x128xf32> -> vector<1x128xf32>
    %225 = arith.mulf %223, %224 : vector<1x128xf32>
    %cst_16 = arith.constant 2.000000e+00 : f32
    %226 = vector.broadcast %cst_16 : f32 to vector<1x128xf32>
    %227 = arith.subf %226, %225 : vector<1x128xf32>
    %228 = arith.mulf %224, %227 : vector<1x128xf32>
    %229 = vector.extract_strided_slice %212 {offsets = [6, 0, 0], sizes = [1, 8, 128], strides = [1, 1, 1]} : vector<8x8x128xf32> to vector<1x8x128xf32>
    %230 = vector.shape_cast %229 : vector<1x8x128xf32> to vector<8x128xf32>
    %231 = vector.broadcast %228 : vector<1x128xf32> to vector<8x128xf32>
    %232 = arith.mulf %230, %231 : vector<8x128xf32>
    %233 = vector.extract_strided_slice %221 {offsets = [0, 6, 0], sizes = [8, 1, 128], strides = [1, 1, 1]} : vector<8x8x128xf32> to vector<8x1x128xf32>
    %234 = vector.extract_strided_slice %37 {offsets = [0, 6, 0], sizes = [8, 1, 1], strides = [1, 1, 1]} : vector<8x8x1xf32> to vector<8x1x1xf32>
    %235 = vector.broadcast %234 : vector<8x1x1xf32> to vector<8x1x128xf32>
    %236 = arith.subf %233, %235 : vector<8x1x128xf32>
    %237 = vector.shape_cast %232 : vector<8x128xf32> to vector<1x8x128xf32>
    %238 = vector.broadcast %236 : vector<8x1x128xf32> to vector<8x8x128xf32>
    %239 = vector.broadcast %237 : vector<1x8x128xf32> to vector<8x8x128xf32>
    %240 = arith.mulf %238, %239 : vector<8x8x128xf32>
    %241 = arith.subf %212, %240 : vector<8x8x128xf32>
    %242 = vector.extract_strided_slice %221 {offsets = [6, 0, 0], sizes = [1, 8, 128], strides = [1, 1, 1]} : vector<8x8x128xf32> to vector<1x8x128xf32>
    %243 = vector.shape_cast %242 : vector<1x8x128xf32> to vector<8x128xf32>
    %244 = vector.broadcast %228 : vector<1x128xf32> to vector<8x128xf32>
    %245 = arith.mulf %243, %244 : vector<8x128xf32>
    %246 = vector.shape_cast %245 : vector<8x128xf32> to vector<1x8x128xf32>
    %247 = vector.broadcast %236 : vector<8x1x128xf32> to vector<8x8x128xf32>
    %248 = vector.broadcast %246 : vector<1x8x128xf32> to vector<8x8x128xf32>
    %249 = arith.mulf %247, %248 : vector<8x8x128xf32>
    %250 = arith.subf %221, %249 : vector<8x8x128xf32>
    %251 = vector.extract_strided_slice %250 {offsets = [7, 7, 0], sizes = [1, 1, 128], strides = [1, 1, 1]} : vector<8x8x128xf32> to vector<1x1x128xf32>
    %252 = vector.shape_cast %251 : vector<1x1x128xf32> to vector<1x128xf32>
    %253 = tpu.reciprocal %252 {approx = true} : vector<1x128xf32> -> vector<1x128xf32>
    %254 = arith.mulf %252, %253 : vector<1x128xf32>
    %cst_17 = arith.constant 2.000000e+00 : f32
    %255 = vector.broadcast %cst_17 : f32 to vector<1x128xf32>
    %256 = arith.subf %255, %254 : vector<1x128xf32>
    %257 = arith.mulf %253, %256 : vector<1x128xf32>
    %258 = vector.extract_strided_slice %241 {offsets = [7, 0, 0], sizes = [1, 8, 128], strides = [1, 1, 1]} : vector<8x8x128xf32> to vector<1x8x128xf32>
    %259 = vector.shape_cast %258 : vector<1x8x128xf32> to vector<8x128xf32>
    %260 = vector.broadcast %257 : vector<1x128xf32> to vector<8x128xf32>
    %261 = arith.mulf %259, %260 : vector<8x128xf32>
    %262 = vector.extract_strided_slice %250 {offsets = [0, 7, 0], sizes = [8, 1, 128], strides = [1, 1, 1]} : vector<8x8x128xf32> to vector<8x1x128xf32>
    %263 = vector.extract_strided_slice %37 {offsets = [0, 7, 0], sizes = [8, 1, 1], strides = [1, 1, 1]} : vector<8x8x1xf32> to vector<8x1x1xf32>
    %264 = vector.broadcast %263 : vector<8x1x1xf32> to vector<8x1x128xf32>
    %265 = arith.subf %262, %264 : vector<8x1x128xf32>
    %266 = vector.shape_cast %261 : vector<8x128xf32> to vector<1x8x128xf32>
    %267 = vector.broadcast %265 : vector<8x1x128xf32> to vector<8x8x128xf32>
    %268 = vector.broadcast %266 : vector<1x8x128xf32> to vector<8x8x128xf32>
    %269 = arith.mulf %267, %268 : vector<8x8x128xf32>
    %270 = arith.subf %241, %269 : vector<8x8x128xf32>
    %271 = tpu.concatenate %49, %78, %107, %136, %165, %194, %223, %252 in 0 : vector<1x128xf32>, vector<1x128xf32>, vector<1x128xf32>, vector<1x128xf32>, vector<1x128xf32>, vector<1x128xf32>, vector<1x128xf32>, vector<1x128xf32> -> vector<8x128xf32>
    %272 = math.log %271 : vector<8x128xf32>
    %cst_18 = arith.constant dense<0.000000e+00> : vector<128xf32>
    %273 = vector.multi_reduction <add>, %272, %cst_18 [0] : vector<8x128xf32> to vector<128xf32>
    %274 = vector.shape_cast %273 : vector<128xf32> to vector<1x128xf32>
    %275 = vector.extract_strided_slice %41 {offsets = [0, 0, 0], sizes = [1, 1, 128], strides = [1, 1, 1]} : vector<8x8x128xf32> to vector<1x1x128xf32>
    %276 = vector.shape_cast %275 : vector<1x1x128xf32> to vector<1x128xf32>
    %277 = vector.extract_strided_slice %41 {offsets = [0, 0, 0], sizes = [1, 8, 128], strides = [1, 1, 1]} : vector<8x8x128xf32> to vector<1x8x128xf32>
    %278 = vector.shape_cast %277 : vector<1x8x128xf32> to vector<8x128xf32>
    %279 = tpu.reciprocal %276 {approx = true} : vector<1x128xf32> -> vector<1x128xf32>
    %280 = arith.mulf %276, %279 : vector<1x128xf32>
    %cst_19 = arith.constant 2.000000e+00 : f32
    %281 = vector.broadcast %cst_19 : f32 to vector<1x128xf32>
    %282 = arith.subf %281, %280 : vector<1x128xf32>
    %283 = arith.mulf %279, %282 : vector<1x128xf32>
    %284 = vector.broadcast %283 : vector<1x128xf32> to vector<8x128xf32>
    %285 = arith.mulf %278, %284 : vector<8x128xf32>
    %286 = vector.extract_strided_slice %41 {offsets = [1, 0, 0], sizes = [7, 8, 128], strides = [1, 1, 1]} : vector<8x8x128xf32> to vector<7x8x128xf32>
    %287 = vector.extract_strided_slice %286 {offsets = [0, 0, 0], sizes = [7, 1, 128], strides = [1, 1, 1]} : vector<7x8x128xf32> to vector<7x1x128xf32>
    %288 = vector.shape_cast %285 : vector<8x128xf32> to vector<1x8x128xf32>
    %289 = vector.broadcast %287 : vector<7x1x128xf32> to vector<7x8x128xf32>
    %290 = vector.broadcast %288 : vector<1x8x128xf32> to vector<7x8x128xf32>
    %291 = arith.mulf %289, %290 : vector<7x8x128xf32>
    %292 = arith.subf %286, %291 : vector<7x8x128xf32>
    %293 = vector.extract_strided_slice %292 {offsets = [0, 1, 0], sizes = [1, 1, 128], strides = [1, 1, 1]} : vector<7x8x128xf32> to vector<1x1x128xf32>
    %294 = vector.shape_cast %293 : vector<1x1x128xf32> to vector<1x128xf32>
    %295 = vector.extract_strided_slice %292 {offsets = [0, 0, 0], sizes = [1, 8, 128], strides = [1, 1, 1]} : vector<7x8x128xf32> to vector<1x8x128xf32>
    %296 = vector.shape_cast %295 : vector<1x8x128xf32> to vector<8x128xf32>
    %297 = tpu.reciprocal %294 {approx = true} : vector<1x128xf32> -> vector<1x128xf32>
    %298 = arith.mulf %294, %297 : vector<1x128xf32>
    %cst_20 = arith.constant 2.000000e+00 : f32
    %299 = vector.broadcast %cst_20 : f32 to vector<1x128xf32>
    %300 = arith.subf %299, %298 : vector<1x128xf32>
    %301 = arith.mulf %297, %300 : vector<1x128xf32>
    %302 = vector.broadcast %301 : vector<1x128xf32> to vector<8x128xf32>
    %303 = arith.mulf %296, %302 : vector<8x128xf32>
    %304 = vector.extract_strided_slice %292 {offsets = [1, 0, 0], sizes = [6, 8, 128], strides = [1, 1, 1]} : vector<7x8x128xf32> to vector<6x8x128xf32>
    %305 = vector.extract_strided_slice %304 {offsets = [0, 1, 0], sizes = [6, 1, 128], strides = [1, 1, 1]} : vector<6x8x128xf32> to vector<6x1x128xf32>
    %306 = vector.shape_cast %303 : vector<8x128xf32> to vector<1x8x128xf32>
    %307 = vector.broadcast %305 : vector<6x1x128xf32> to vector<6x8x128xf32>
    %308 = vector.broadcast %306 : vector<1x8x128xf32> to vector<6x8x128xf32>
    %309 = arith.mulf %307, %308 : vector<6x8x128xf32>
    %310 = arith.subf %304, %309 : vector<6x8x128xf32>
    %311 = vector.extract_strided_slice %310 {offsets = [0, 2, 0], sizes = [1, 1, 128], strides = [1, 1, 1]} : vector<6x8x128xf32> to vector<1x1x128xf32>
    %312 = vector.shape_cast %311 : vector<1x1x128xf32> to vector<1x128xf32>
    %313 = vector.extract_strided_slice %310 {offsets = [0, 0, 0], sizes = [1, 8, 128], strides = [1, 1, 1]} : vector<6x8x128xf32> to vector<1x8x128xf32>
    %314 = vector.shape_cast %313 : vector<1x8x128xf32> to vector<8x128xf32>
    %315 = tpu.reciprocal %312 {approx = true} : vector<1x128xf32> -> vector<1x128xf32>
    %316 = arith.mulf %312, %315 : vector<1x128xf32>
    %cst_21 = arith.constant 2.000000e+00 : f32
    %317 = vector.broadcast %cst_21 : f32 to vector<1x128xf32>
    %318 = arith.subf %317, %316 : vector<1x128xf32>
    %319 = arith.mulf %315, %318 : vector<1x128xf32>
    %320 = vector.broadcast %319 : vector<1x128xf32> to vector<8x128xf32>
    %321 = arith.mulf %314, %320 : vector<8x128xf32>
    %322 = vector.extract_strided_slice %310 {offsets = [1, 0, 0], sizes = [5, 8, 128], strides = [1, 1, 1]} : vector<6x8x128xf32> to vector<5x8x128xf32>
    %323 = vector.extract_strided_slice %322 {offsets = [0, 2, 0], sizes = [5, 1, 128], strides = [1, 1, 1]} : vector<5x8x128xf32> to vector<5x1x128xf32>
    %324 = vector.shape_cast %321 : vector<8x128xf32> to vector<1x8x128xf32>
    %325 = vector.broadcast %323 : vector<5x1x128xf32> to vector<5x8x128xf32>
    %326 = vector.broadcast %324 : vector<1x8x128xf32> to vector<5x8x128xf32>
    %327 = arith.mulf %325, %326 : vector<5x8x128xf32>
    %328 = arith.subf %322, %327 : vector<5x8x128xf32>
    %329 = vector.extract_strided_slice %328 {offsets = [0, 3, 0], sizes = [1, 1, 128], strides = [1, 1, 1]} : vector<5x8x128xf32> to vector<1x1x128xf32>
    %330 = vector.shape_cast %329 : vector<1x1x128xf32> to vector<1x128xf32>
    %331 = vector.extract_strided_slice %328 {offsets = [0, 0, 0], sizes = [1, 8, 128], strides = [1, 1, 1]} : vector<5x8x128xf32> to vector<1x8x128xf32>
    %332 = vector.shape_cast %331 : vector<1x8x128xf32> to vector<8x128xf32>
    %333 = tpu.reciprocal %330 {approx = true} : vector<1x128xf32> -> vector<1x128xf32>
    %334 = arith.mulf %330, %333 : vector<1x128xf32>
    %cst_22 = arith.constant 2.000000e+00 : f32
    %335 = vector.broadcast %cst_22 : f32 to vector<1x128xf32>
    %336 = arith.subf %335, %334 : vector<1x128xf32>
    %337 = arith.mulf %333, %336 : vector<1x128xf32>
    %338 = vector.broadcast %337 : vector<1x128xf32> to vector<8x128xf32>
    %339 = arith.mulf %332, %338 : vector<8x128xf32>
    %340 = vector.extract_strided_slice %328 {offsets = [1, 0, 0], sizes = [4, 8, 128], strides = [1, 1, 1]} : vector<5x8x128xf32> to vector<4x8x128xf32>
    %341 = vector.extract_strided_slice %340 {offsets = [0, 3, 0], sizes = [4, 1, 128], strides = [1, 1, 1]} : vector<4x8x128xf32> to vector<4x1x128xf32>
    %342 = vector.shape_cast %339 : vector<8x128xf32> to vector<1x8x128xf32>
    %343 = vector.broadcast %341 : vector<4x1x128xf32> to vector<4x8x128xf32>
    %344 = vector.broadcast %342 : vector<1x8x128xf32> to vector<4x8x128xf32>
    %345 = arith.mulf %343, %344 : vector<4x8x128xf32>
    %346 = arith.subf %340, %345 : vector<4x8x128xf32>
    %347 = vector.extract_strided_slice %346 {offsets = [0, 4, 0], sizes = [1, 1, 128], strides = [1, 1, 1]} : vector<4x8x128xf32> to vector<1x1x128xf32>
    %348 = vector.shape_cast %347 : vector<1x1x128xf32> to vector<1x128xf32>
    %349 = vector.extract_strided_slice %346 {offsets = [0, 0, 0], sizes = [1, 8, 128], strides = [1, 1, 1]} : vector<4x8x128xf32> to vector<1x8x128xf32>
    %350 = vector.shape_cast %349 : vector<1x8x128xf32> to vector<8x128xf32>
    %351 = tpu.reciprocal %348 {approx = true} : vector<1x128xf32> -> vector<1x128xf32>
    %352 = arith.mulf %348, %351 : vector<1x128xf32>
    %cst_23 = arith.constant 2.000000e+00 : f32
    %353 = vector.broadcast %cst_23 : f32 to vector<1x128xf32>
    %354 = arith.subf %353, %352 : vector<1x128xf32>
    %355 = arith.mulf %351, %354 : vector<1x128xf32>
    %356 = vector.broadcast %355 : vector<1x128xf32> to vector<8x128xf32>
    %357 = arith.mulf %350, %356 : vector<8x128xf32>
    %358 = vector.extract_strided_slice %346 {offsets = [1, 0, 0], sizes = [3, 8, 128], strides = [1, 1, 1]} : vector<4x8x128xf32> to vector<3x8x128xf32>
    %359 = vector.extract_strided_slice %358 {offsets = [0, 4, 0], sizes = [3, 1, 128], strides = [1, 1, 1]} : vector<3x8x128xf32> to vector<3x1x128xf32>
    %360 = vector.shape_cast %357 : vector<8x128xf32> to vector<1x8x128xf32>
    %361 = vector.broadcast %359 : vector<3x1x128xf32> to vector<3x8x128xf32>
    %362 = vector.broadcast %360 : vector<1x8x128xf32> to vector<3x8x128xf32>
    %363 = arith.mulf %361, %362 : vector<3x8x128xf32>
    %364 = arith.subf %358, %363 : vector<3x8x128xf32>
    %365 = vector.extract_strided_slice %364 {offsets = [0, 5, 0], sizes = [1, 1, 128], strides = [1, 1, 1]} : vector<3x8x128xf32> to vector<1x1x128xf32>
    %366 = vector.shape_cast %365 : vector<1x1x128xf32> to vector<1x128xf32>
    %367 = vector.extract_strided_slice %364 {offsets = [0, 0, 0], sizes = [1, 8, 128], strides = [1, 1, 1]} : vector<3x8x128xf32> to vector<1x8x128xf32>
    %368 = vector.shape_cast %367 : vector<1x8x128xf32> to vector<8x128xf32>
    %369 = tpu.reciprocal %366 {approx = true} : vector<1x128xf32> -> vector<1x128xf32>
    %370 = arith.mulf %366, %369 : vector<1x128xf32>
    %cst_24 = arith.constant 2.000000e+00 : f32
    %371 = vector.broadcast %cst_24 : f32 to vector<1x128xf32>
    %372 = arith.subf %371, %370 : vector<1x128xf32>
    %373 = arith.mulf %369, %372 : vector<1x128xf32>
    %374 = vector.broadcast %373 : vector<1x128xf32> to vector<8x128xf32>
    %375 = arith.mulf %368, %374 : vector<8x128xf32>
    %376 = vector.extract_strided_slice %364 {offsets = [1, 0, 0], sizes = [2, 8, 128], strides = [1, 1, 1]} : vector<3x8x128xf32> to vector<2x8x128xf32>
    %377 = vector.extract_strided_slice %376 {offsets = [0, 5, 0], sizes = [2, 1, 128], strides = [1, 1, 1]} : vector<2x8x128xf32> to vector<2x1x128xf32>
    %378 = vector.shape_cast %375 : vector<8x128xf32> to vector<1x8x128xf32>
    %379 = vector.broadcast %377 : vector<2x1x128xf32> to vector<2x8x128xf32>
    %380 = vector.broadcast %378 : vector<1x8x128xf32> to vector<2x8x128xf32>
    %381 = arith.mulf %379, %380 : vector<2x8x128xf32>
    %382 = arith.subf %376, %381 : vector<2x8x128xf32>
    %383 = vector.extract_strided_slice %382 {offsets = [0, 6, 0], sizes = [1, 1, 128], strides = [1, 1, 1]} : vector<2x8x128xf32> to vector<1x1x128xf32>
    %384 = vector.shape_cast %383 : vector<1x1x128xf32> to vector<1x128xf32>
    %385 = vector.extract_strided_slice %382 {offsets = [0, 0, 0], sizes = [1, 8, 128], strides = [1, 1, 1]} : vector<2x8x128xf32> to vector<1x8x128xf32>
    %386 = vector.shape_cast %385 : vector<1x8x128xf32> to vector<8x128xf32>
    %387 = tpu.reciprocal %384 {approx = true} : vector<1x128xf32> -> vector<1x128xf32>
    %388 = arith.mulf %384, %387 : vector<1x128xf32>
    %cst_25 = arith.constant 2.000000e+00 : f32
    %389 = vector.broadcast %cst_25 : f32 to vector<1x128xf32>
    %390 = arith.subf %389, %388 : vector<1x128xf32>
    %391 = arith.mulf %387, %390 : vector<1x128xf32>
    %392 = vector.broadcast %391 : vector<1x128xf32> to vector<8x128xf32>
    %393 = arith.mulf %386, %392 : vector<8x128xf32>
    %394 = vector.extract_strided_slice %382 {offsets = [1, 0, 0], sizes = [1, 8, 128], strides = [1, 1, 1]} : vector<2x8x128xf32> to vector<1x8x128xf32>
    %395 = vector.extract_strided_slice %394 {offsets = [0, 6, 0], sizes = [1, 1, 128], strides = [1, 1, 1]} : vector<1x8x128xf32> to vector<1x1x128xf32>
    %396 = vector.shape_cast %393 : vector<8x128xf32> to vector<1x8x128xf32>
    %397 = vector.broadcast %395 : vector<1x1x128xf32> to vector<1x8x128xf32>
    %398 = arith.mulf %397, %396 : vector<1x8x128xf32>
    %399 = arith.subf %394, %398 : vector<1x8x128xf32>
    %400 = vector.extract_strided_slice %399 {offsets = [0, 7, 0], sizes = [1, 1, 128], strides = [1, 1, 1]} : vector<1x8x128xf32> to vector<1x1x128xf32>
    %401 = vector.shape_cast %400 : vector<1x1x128xf32> to vector<1x128xf32>
    %402 = tpu.concatenate %276, %294, %312, %330, %348, %366, %384, %401 in 0 : vector<1x128xf32>, vector<1x128xf32>, vector<1x128xf32>, vector<1x128xf32>, vector<1x128xf32>, vector<1x128xf32>, vector<1x128xf32>, vector<1x128xf32> -> vector<8x128xf32>
    %403 = math.log %402 : vector<8x128xf32>
    %cst_26 = arith.constant dense<0.000000e+00> : vector<128xf32>
    %404 = vector.multi_reduction <add>, %403, %cst_26 [0] : vector<8x128xf32> to vector<128xf32>
    %405 = vector.shape_cast %404 : vector<128xf32> to vector<1x128xf32>
    %406 = arith.subf %1, %0 : vector<8x128xf32>
    %407 = vector.shape_cast %406 : vector<8x128xf32> to vector<8x1x128xf32>
    %408 = vector.shape_cast %406 : vector<8x128xf32> to vector<1x8x128xf32>
    %409 = vector.broadcast %407 : vector<8x1x128xf32> to vector<8x8x128xf32>
    %410 = vector.broadcast %408 : vector<1x8x128xf32> to vector<8x8x128xf32>
    %411 = arith.mulf %409, %410 : vector<8x8x128xf32>
    %412 = arith.addf %41, %411 : vector<8x8x128xf32>
    %413 = arith.mulf %270, %412 : vector<8x8x128xf32>
    %cst_27 = arith.constant dense<0.000000e+00> : vector<8x128xf32>
    %414 = vector.multi_reduction <add>, %413, %cst_27 [0] : vector<8x8x128xf32> to vector<8x128xf32>
    %cst_28 = arith.constant dense<0.000000e+00> : vector<128xf32>
    %415 = vector.multi_reduction <add>, %414, %cst_28 [0] : vector<8x128xf32> to vector<128xf32>
    %416 = vector.shape_cast %415 : vector<128xf32> to vector<1x128xf32>
    %417 = arith.addf %416, %274 : vector<1x128xf32>
    %418 = arith.subf %417, %405 : vector<1x128xf32>
    %cst_29 = arith.constant 8.000000e+00 : f32
    %419 = vector.broadcast %cst_29 : f32 to vector<1x128xf32>
    %420 = arith.subf %418, %419 : vector<1x128xf32>
    %cst_30 = arith.constant 5.000000e-01 : f32
    %421 = vector.broadcast %cst_30 : f32 to vector<1x128xf32>
    %422 = arith.mulf %421, %420 : vector<1x128xf32>
    %c0_31 = arith.constant 0 : index
    %c0_32 = arith.constant 0 : index
    %423 = vector.load %arg5[%c0_31, %c0_32] : memref<1x128xf32, #tpu.memory_space<vmem>>, vector<1x128xf32>
    tpu.vector_store %arg5[%c0_31, %c0_32], %422 {strides = array<i32>} : memref<1x128xf32, #tpu.memory_space<vmem>>, vector<1x128xf32>,
    return
  }
  func.func @transform_0(%arg0: i32) -> (i32, i32) {
    %c0_i32 = arith.constant 0 : i32
    %c0_i32_0 = arith.constant 0 : i32
    return %c0_i32, %arg0 : i32, i32
  }
  func.func @transform_1(%arg0: i32) -> (i32, i32, i32) {
    %c0_i32 = arith.constant 0 : i32
    %c0_i32_0 = arith.constant 0 : i32
    %c0_i32_1 = arith.constant 0 : i32
    return %c0_i32, %c0_i32_0, %arg0 : i32, i32, i32
  }
  func.func @transform_2(%arg0: i32) -> (i32, i32) {
    %c0_i32 = arith.constant 0 : i32
    %c0_i32_0 = arith.constant 0 : i32
    return %c0_i32, %arg0 : i32, i32
  }
  func.func @transform_3(%arg0: i32) -> (i32, i32, i32) {
    %c0_i32 = arith.constant 0 : i32
    %c0_i32_0 = arith.constant 0 : i32
    %c0_i32_1 = arith.constant 0 : i32
    return %c0_i32, %c0_i32_0, %arg0 : i32, i32, i32
  }
  func.func @transform_4(%arg0: i32) -> (i32, i32) {
    %c0_i32 = arith.constant 0 : i32
    %c0_i32_0 = arith.constant 0 : i32
    return %c0_i32, %arg0 : i32, i32
  }
}

</mosaic_0001>

<llo_original>
// kernel: tpu_custom_call.1
$region0: #{tpu_custom_call.1}
  #allocation0 [shape = 'u32[]', space=smem, size = 0x4, offset = 0x4, fixed_abs, tag = 'smem constant byte address 0x4 - core index']
  #allocation1 [shape = 'u32[144,128]{1,0:T(1,128)}', space=vmem, size = 0x12000, scoped, tag = 'internal scratch']
  %s0 = inlined_call_operand.hbm [shape: f32[8,128], index: 0, kind: input, shape index: {}]
  %s1 = inlined_call_operand.hbm [shape: f32[8,8,128], index: 1, kind: input, shape index: {}]
  %s2 = inlined_call_operand.hbm [shape: f32[8,128], index: 2, kind: input, shape index: {}]
  %s3 = inlined_call_operand.hbm [shape: f32[8,8,128], index: 3, kind: input, shape index: {}]
  %s4 = inlined_call_operand.hbm [shape: f32[1,128], index: 4, kind: output, shape index: {}]
  %s5 = sld [smem:[#allocation0]]
  $region42: #{tpu_custom_call.1} parent=0
    _
  %s7 = ssub.s32 1, %s5
  %s8 = scalar_select 0, %s7, %s5
  $region1: #{tpu_custom_call.1} parent=0
    #allocation2 [shape = 'u8[4096]{0}', space=vmem, size = 0x1000, scoped, tag = 'input window, operand 0, single buffered']
    #allocation3 [shape = 's32[1]{0}', space=sflag, size = 0x4, scoped, tag = 'scoped memory for tpu_custom_call.1']
    #allocation4 [shape = 's32[1]{0}', space=sflag, size = 0x4, scoped, tag = 'scoped memory for tpu_custom_call.1']
    #allocation5 [shape = 'u8[32768]{0}', space=vmem, size = 0x8000, scoped, tag = 'input window, operand 1, single buffered']
    #allocation6 [shape = 's32[1]{0}', space=sflag, size = 0x4, scoped, tag = 'scoped memory for tpu_custom_call.1']
    #allocation7 [shape = 'u8[4096]{0}', space=vmem, size = 0x1000, scoped, tag = 'input window, operand 2, single buffered']
    #allocation8 [shape = 'u8[32768]{0}', space=vmem, size = 0x8000, scoped, tag = 'input window, operand 3, single buffered']
    #allocation9 [shape = 's32[1]{0}', space=sflag, size = 0x4, scoped, tag = 'scoped memory for tpu_custom_call.1']
    #allocation10 [shape = 'u8[512]{0}', space=vmem, size = 0x400, scoped, tag = 'output window, operand 0, single buffered']
    %9 = vsyncpa [#allocation3], 0
    %10 = vsyncpa [#allocation6], 0
    %11 = vsyncpa [#allocation9], 0
    %12 = vsyncpa [#allocation4], 0
    // Predicated region
    $region2: #{tpu_custom_call.1} parent=1 // pred_check
      _
    $region3: #{tpu_custom_call.1} parent=1 // pred_check_branch
      %14 = sbr.rel (0) target = $region5
    $region4: #{tpu_custom_call.1} parent=1 // pred_region
      %s16 = ssub.s32 128, 128
      %17 = vsyncadd [#allocation3], %s16
      %s19 = sshll.u32 [#allocation2], 4
      %s20 = int_to_ptr.vmem [resolvable:$true] %s19
      %22 = dma.hbm_to_vmem [thread:$0]  %s0, 128, %s20, [#allocation3]
    $region5: #{tpu_custom_call.1} parent=1 // pred_fallthru
      _
    // Predicated region
    $region6: #{tpu_custom_call.1} parent=1 // pred_check
      _
    $region7: #{tpu_custom_call.1} parent=1 // pred_check_branch
      %24 = sbr.rel (0) target = $region9
    $region8: #{tpu_custom_call.1} parent=1 // pred_region
      %s26 = ssub.s32 1024, 1024
      %27 = vsyncadd [#allocation6], %s26
      %s28 = sshll.u32 [#allocation5], 4
      %s29 = int_to_ptr.vmem [resolvable:$true] %s28
      %34 = dma.hbm_to_vmem [thread:$0]  %s1, 1024, %s29, [#allocation6], 128, 128, 8
    $region9: #{tpu_custom_call.1} parent=1 // pred_fallthru
      _
    // Predicated region
    $region10: #{tpu_custom_call.1} parent=1 // pred_check
      _
    $region11: #{tpu_custom_call.1} parent=1 // pred_check_branch
      %36 = sbr.rel (0) target = $region13
    $region12: #{tpu_custom_call.1} parent=1 // pred_region
      %s38 = ssub.s32 128, 128
      %39 = vsyncadd [#allocation6], %s38
      %s41 = sshll.u32 [#allocation7], 4
      %s42 = int_to_ptr.vmem [resolvable:$true] %s41
      %44 = dma.hbm_to_vmem [thread:$0]  %s2, 128, %s42, [#allocation6]
    $region13: #{tpu_custom_call.1} parent=1 // pred_fallthru
      _
    // Predicated region
    $region14: #{tpu_custom_call.1} parent=1 // pred_check
      _
    $region15: #{tpu_custom_call.1} parent=1 // pred_check_branch
      %46 = sbr.rel (0) target = $region17
    $region16: #{tpu_custom_call.1} parent=1 // pred_region
      %s48 = ssub.s32 1024, 1024
      %49 = vsyncadd [#allocation9], %s48
      %s50 = sshll.u32 [#allocation8], 4
      %s51 = int_to_ptr.vmem [resolvable:$true] %s50
      %56 = dma.hbm_to_vmem [thread:$0]  %s3, 1024, %s51, [#allocation9], 128, 128, 8
    $region17: #{tpu_custom_call.1} parent=1 // pred_fallthru
      _
    // Predicated region
    $region18: #{tpu_custom_call.1} parent=1 // pred_check
      _
    $region19: #{tpu_custom_call.1} parent=1 // pred_check_branch
      %58 = sbr.rel (0) target = $region21
    $region20: #{tpu_custom_call.1} parent=1 // pred_region
      %59 = dma.done [#allocation3], 128
    $region21: #{tpu_custom_call.1} parent=1 // pred_fallthru
      _
    // Predicated region
    $region22: #{tpu_custom_call.1} parent=1 // pred_check
      _
    $region23: #{tpu_custom_call.1} parent=1 // pred_check_branch
      %61 = sbr.rel (0) target = $region25
    $region24: #{tpu_custom_call.1} parent=1 // pred_region
      %62 = dma.done [#allocation6], 1024
    $region25: #{tpu_custom_call.1} parent=1 // pred_fallthru
      _
    // Predicated region
    $region26: #{tpu_custom_call.1} parent=1 // pred_check
      _
    $region27: #{tpu_custom_call.1} parent=1 // pred_check_branch
      %64 = sbr.rel (0) target = $region29
    $region28: #{tpu_custom_call.1} parent=1 // pred_region
      %65 = dma.done [#allocation6], 128
    $region29: #{tpu_custom_call.1} parent=1 // pred_fallthru
      _
    // Predicated region
    $region30: #{tpu_custom_call.1} parent=1 // pred_check
      _
    $region31: #{tpu_custom_call.1} parent=1 // pred_check_branch
      %67 = sbr.rel (0) target = $region33
    $region32: #{tpu_custom_call.1} parent=1 // pred_region
      %68 = dma.done [#allocation9], 1024
    $region33: #{tpu_custom_call.1} parent=1 // pred_fallthru
      _
    %v69 = vld [vmem:[#allocation2] sm:$0xff]
    %v70 = vld [vmem:[#allocation7] sm:$0xff]
    %v71 = vld [vmem:[#allocation5] sm:$0xff]
    %v72 = vld [vmem:[#allocation5 + $0x8] sm:$0xff]
    %v73 = vld [vmem:[#allocation5 + $0x10] sm:$0xff]
    %v74 = vld [vmem:[#allocation5 + $0x18] sm:$0xff]
    %v75 = vld [vmem:[#allocation5 + $0x20] sm:$0xff]
    %v76 = vld [vmem:[#allocation5 + $0x28] sm:$0xff]
    %v77 = vld [vmem:[#allocation5 + $0x30] sm:$0xff]
    %v78 = vld [vmem:[#allocation5 + $0x38] sm:$0xff]
    %v79 = vld [vmem:[#allocation8] sm:$0xff]
    %v80 = vld [vmem:[#allocation8 + $0x8] sm:$0xff]
    %v81 = vld [vmem:[#allocation8 + $0x10] sm:$0xff]
    %v82 = vld [vmem:[#allocation8 + $0x18] sm:$0xff]
    %v83 = vld [vmem:[#allocation8 + $0x20] sm:$0xff]
    %v84 = vld [vmem:[#allocation8 + $0x28] sm:$0xff]
    %v85 = vld [vmem:[#allocation8 + $0x30] sm:$0xff]
    %v86 = vld [vmem:[#allocation8 + $0x38] sm:$0xff]
    %v87 = vlaneseq
    %v88 = vshrl.u32 %v87, 7
    %vm89 = vcmp.eq.s32.totalorder %v88, 0
    %v90 = vsel %vm89, 1, 0
    %v91 = vcvt.s32.f32 %v90
    %vm92 = vcmp.eq.s32.totalorder %v88, 1
    %v93 = vsel %vm92, 1, 0
    %v94 = vcvt.s32.f32 %v93
    %vm95 = vcmp.eq.s32.totalorder %v88, 2
    %v96 = vsel %vm95, 1, 0
    %v97 = vcvt.s32.f32 %v96
    %vm98 = vcmp.eq.s32.totalorder %v88, 3
    %v99 = vsel %vm98, 1, 0
    %v100 = vcvt.s32.f32 %v99
    %vm101 = vcmp.eq.s32.totalorder %v88, 4
    %v102 = vsel %vm101, 1, 0
    %v103 = vcvt.s32.f32 %v102
    %vm104 = vcmp.eq.s32.totalorder %v88, 5
    %v105 = vsel %vm104, 1, 0
    %v106 = vcvt.s32.f32 %v105
    %vm107 = vcmp.eq.s32.totalorder %v88, 6
    %v108 = vsel %vm107, 1, 0
    %v109 = vcvt.s32.f32 %v108
    %vm110 = vcmp.eq.s32.totalorder %v88, 7
    %v111 = vsel %vm110, 1, 0
    %v112 = vcvt.s32.f32 %v111
    %v113 = vmul.f32 %v91, 0.001
    %v114 = vmul.f32 %v94, 0.001
    %v115 = vmul.f32 %v97, 0.001
    %v116 = vmul.f32 %v100, 0.001
    %v117 = vmul.f32 %v103, 0.001
    %v118 = vmul.f32 %v106, 0.001
    %v119 = vmul.f32 %v109, 0.001
    %v120 = vmul.f32 %v112, 0.001
    %122 = vset.pattern.permute.xlu0 0
    %123 = vperm.xlu0 %122, %v113
    %v124 = vpop.permute.xlu0 %123
    %127 = vset.pattern.permute.xlu0 0
    %128 = vperm.xlu0 %127, %v114
    %v129 = vpop.permute.xlu0 %128
    %132 = vset.pattern.permute.xlu0 0
    %133 = vperm.xlu0 %132, %v115
    %v134 = vpop.permute.xlu0 %133
    %137 = vset.pattern.permute.xlu0 0
    %138 = vperm.xlu0 %137, %v116
    %v139 = vpop.permute.xlu0 %138
    %142 = vset.pattern.permute.xlu0 0
    %143 = vperm.xlu0 %142, %v117
    %v144 = vpop.permute.xlu0 %143
    %147 = vset.pattern.permute.xlu0 0
    %148 = vperm.xlu0 %147, %v118
    %v149 = vpop.permute.xlu0 %148
    %152 = vset.pattern.permute.xlu0 0
    %153 = vperm.xlu0 %152, %v119
    %v154 = vpop.permute.xlu0 %153
    %157 = vset.pattern.permute.xlu0 0
    %158 = vperm.xlu0 %157, %v120
    %v159 = vpop.permute.xlu0 %158
    %v161 = vadd.f32 %v71, %v124
    %v162 = vadd.f32 %v72, %v129
    %v163 = vadd.f32 %v73, %v134
    %v164 = vadd.f32 %v74, %v139
    %v165 = vadd.f32 %v75, %v144
    %v166 = vadd.f32 %v76, %v149
    %v167 = vadd.f32 %v77, %v154
    %v168 = vadd.f32 %v78, %v159
    %v169 = vadd.f32 %v79, %v124
    %v170 = vadd.f32 %v80, %v129
    %v171 = vadd.f32 %v81, %v134
    %v172 = vadd.f32 %v82, %v139
    %v173 = vadd.f32 %v83, %v144
    %v174 = vadd.f32 %v84, %v149
    %v175 = vadd.f32 %v85, %v154
    %v176 = vadd.f32 %v86, %v159
    %178 = vset.pattern.permute.xlu0 0
    %179 = vperm.xlu0 %178, %v91
    %v180 = vpop.permute.xlu0 %179
    %183 = vset.pattern.permute.xlu0 0
    %184 = vperm.xlu0 %183, %v94
    %v185 = vpop.permute.xlu0 %184
    %188 = vset.pattern.permute.xlu0 0
    %189 = vperm.xlu0 %188, %v97
    %v190 = vpop.permute.xlu0 %189
    %193 = vset.pattern.permute.xlu0 0
    %194 = vperm.xlu0 %193, %v100
    %v195 = vpop.permute.xlu0 %194
    %198 = vset.pattern.permute.xlu0 0
    %199 = vperm.xlu0 %198, %v103
    %v200 = vpop.permute.xlu0 %199
    %203 = vset.pattern.permute.xlu0 0
    %204 = vperm.xlu0 %203, %v106
    %v205 = vpop.permute.xlu0 %204
    %208 = vset.pattern.permute.xlu0 0
    %209 = vperm.xlu0 %208, %v109
    %v210 = vpop.permute.xlu0 %209
    %213 = vset.pattern.permute.xlu0 0
    %214 = vperm.xlu0 %213, %v112
    %v215 = vpop.permute.xlu0 %214
    %v217 = vrcp.pop %v169
    %v218 = vmul.f32 %v169, %v217
    %v219 = vsub.f32 2.0, %v218
    %v220 = vmul.f32 %v217, %v219
    %v221 = vlaneseq
    %v222 = vshrl.u32 %v221, 7
    %v223 = vsub.s32 0, %v222
    %v224 = vrot.slane %v220, %v223
    %v225 = vmul.f32 %v180, %v224
    %v226 = vsub.f32 %v169, %v180
    %v227 = vsub.f32 %v170, %v185
    %v228 = vsub.f32 %v171, %v190
    %v229 = vsub.f32 %v172, %v195
    %v230 = vsub.f32 %v173, %v200
    %v231 = vsub.f32 %v174, %v205
    %v232 = vsub.f32 %v175, %v210
    %v233 = vsub.f32 %v176, %v215
    %v234 = vlaneseq
    %v235 = vshrl.u32 %v234, 7
    %v236 = vsub.s32 0, %v235
    %v237 = vrot.slane %v226, %v236
    %v238 = vlaneseq
    %v239 = vshrl.u32 %v238, 7
    %v240 = vsub.s32 0, %v239
    %v241 = vrot.slane %v227, %v240
    %v242 = vlaneseq
    %v243 = vshrl.u32 %v242, 7
    %v244 = vsub.s32 0, %v243
    %v245 = vrot.slane %v228, %v244
    %v246 = vlaneseq
    %v247 = vshrl.u32 %v246, 7
    %v248 = vsub.s32 0, %v247
    %v249 = vrot.slane %v229, %v248
    %v250 = vlaneseq
    %v251 = vshrl.u32 %v250, 7
    %v252 = vsub.s32 0, %v251
    %v253 = vrot.slane %v230, %v252
    %v254 = vlaneseq
    %v255 = vshrl.u32 %v254, 7
    %v256 = vsub.s32 0, %v255
    %v257 = vrot.slane %v231, %v256
    %v258 = vlaneseq
    %v259 = vshrl.u32 %v258, 7
    %v260 = vsub.s32 0, %v259
    %v261 = vrot.slane %v232, %v260
    %v262 = vlaneseq
    %v263 = vshrl.u32 %v262, 7
    %v264 = vsub.s32 0, %v263
    %v265 = vrot.slane %v233, %v264
    %v266 = vmul.f32 %v237, %v225
    %v267 = vmul.f32 %v241, %v225
    %v268 = vmul.f32 %v245, %v225
    %v269 = vmul.f32 %v249, %v225
    %v270 = vmul.f32 %v253, %v225
    %v271 = vmul.f32 %v257, %v225
    %v272 = vmul.f32 %v261, %v225
    %v273 = vmul.f32 %v265, %v225
    %v274 = vsub.f32 %v180, %v266
    %v275 = vsub.f32 %v185, %v267
    %v276 = vsub.f32 %v190, %v268
    %v277 = vsub.f32 %v195, %v269
    %v278 = vsub.f32 %v200, %v270
    %v279 = vsub.f32 %v205, %v271
    %v280 = vsub.f32 %v210, %v272
    %v281 = vsub.f32 %v215, %v273
    %v282 = vmul.f32 %v169, %v224
    %v283 = vmul.f32 %v237, %v282
    %v284 = vmul.f32 %v241, %v282
    %v285 = vmul.f32 %v245, %v282
    %v286 = vmul.f32 %v249, %v282
    %v287 = vmul.f32 %v253, %v282
    %v288 = vmul.f32 %v257, %v282
    %v289 = vmul.f32 %v261, %v282
    %v290 = vmul.f32 %v265, %v282
    %v291 = vsub.f32 %v169, %v283
    %v292 = vsub.f32 %v170, %v284
    %v293 = vsub.f32 %v171, %v285
    %v294 = vsub.f32 %v172, %v286
    %v295 = vsub.f32 %v173, %v287
    %v296 = vsub.f32 %v174, %v288
    %v297 = vsub.f32 %v175, %v289
    %v298 = vsub.f32 %v176, %v290
    %v299 = vrcp.pop %v292
    %v300 = vmul.f32 %v292, %v299
    %v301 = vsub.f32 2.0, %v300
    %v302 = vmul.f32 %v299, %v301
    %v303 = vlaneseq
    %v304 = vshrl.u32 %v303, 7
    %v305 = vsub.s32 1, %v304
    %v306 = vrot.slane %v302, %v305
    %v307 = vmul.f32 %v275, %v306
    %v308 = vsub.f32 %v291, %v180
    %v309 = vsub.f32 %v292, %v185
    %v310 = vsub.f32 %v293, %v190
    %v311 = vsub.f32 %v294, %v195
    %v312 = vsub.f32 %v295, %v200
    %v313 = vsub.f32 %v296, %v205
    %v314 = vsub.f32 %v297, %v210
    %v315 = vsub.f32 %v298, %v215
    %v316 = vlaneseq
    %v317 = vshrl.u32 %v316, 7
    %v318 = vsub.s32 1, %v317
    %v319 = vrot.slane %v308, %v318
    %v320 = vlaneseq
    %v321 = vshrl.u32 %v320, 7
    %v322 = vsub.s32 1, %v321
    %v323 = vrot.slane %v309, %v322
    %v324 = vlaneseq
    %v325 = vshrl.u32 %v324, 7
    %v326 = vsub.s32 1, %v325
    %v327 = vrot.slane %v310, %v326
    %v328 = vlaneseq
    %v329 = vshrl.u32 %v328, 7
    %v330 = vsub.s32 1, %v329
    %v331 = vrot.slane %v311, %v330
    %v332 = vlaneseq
    %v333 = vshrl.u32 %v332, 7
    %v334 = vsub.s32 1, %v333
    %v335 = vrot.slane %v312, %v334
    %v336 = vlaneseq
    %v337 = vshrl.u32 %v336, 7
    %v338 = vsub.s32 1, %v337
    %v339 = vrot.slane %v313, %v338
    %v340 = vlaneseq
    %v341 = vshrl.u32 %v340, 7
    %v342 = vsub.s32 1, %v341
    %v343 = vrot.slane %v314, %v342
    %v344 = vlaneseq
    %v345 = vshrl.u32 %v344, 7
    %v346 = vsub.s32 1, %v345
    %v347 = vrot.slane %v315, %v346
    %v348 = vmul.f32 %v319, %v307
    %v349 = vmul.f32 %v323, %v307
    %v350 = vmul.f32 %v327, %v307
    %v351 = vmul.f32 %v331, %v307
    %v352 = vmul.f32 %v335, %v307
    %v353 = vmul.f32 %v339, %v307
    %v354 = vmul.f32 %v343, %v307
    %v355 = vmul.f32 %v347, %v307
    %v356 = vsub.f32 %v274, %v348
    %v357 = vsub.f32 %v275, %v349
    %v358 = vsub.f32 %v276, %v350
    %v359 = vsub.f32 %v277, %v351
    %v360 = vsub.f32 %v278, %v352
    %v361 = vsub.f32 %v279, %v353
    %v362 = vsub.f32 %v280, %v354
    %v363 = vsub.f32 %v281, %v355
    %v364 = vmul.f32 %v292, %v306
    %v365 = vmul.f32 %v319, %v364
    %v366 = vmul.f32 %v323, %v364
    %v367 = vmul.f32 %v327, %v364
    %v368 = vmul.f32 %v331, %v364
    %v369 = vmul.f32 %v335, %v364
    %v370 = vmul.f32 %v339, %v364
    %v371 = vmul.f32 %v343, %v364
    %v372 = vmul.f32 %v347, %v364
    %v373 = vsub.f32 %v291, %v365
    %v374 = vsub.f32 %v292, %v366
    %v375 = vsub.f32 %v293, %v367
    %v376 = vsub.f32 %v294, %v368
    %v377 = vsub.f32 %v295, %v369
    %v378 = vsub.f32 %v296, %v370
    %v379 = vsub.f32 %v297, %v371
    %v380 = vsub.f32 %v298, %v372
    %v381 = vrcp.pop %v375
    %v382 = vmul.f32 %v375, %v381
    %v383 = vsub.f32 2.0, %v382
    %v384 = vmul.f32 %v381, %v383
    %v385 = vlaneseq
    %v386 = vshrl.u32 %v385, 7
    %v387 = vsub.s32 2, %v386
    %v388 = vrot.slane %v384, %v387
    %v389 = vmul.f32 %v358, %v388
    %v390 = vsub.f32 %v373, %v180
    %v391 = vsub.f32 %v374, %v185
    %v392 = vsub.f32 %v375, %v190
    %v393 = vsub.f32 %v376, %v195
    %v394 = vsub.f32 %v377, %v200
    %v395 = vsub.f32 %v378, %v205
    %v396 = vsub.f32 %v379, %v210
    %v397 = vsub.f32 %v380, %v215
    %v398 = vlaneseq
    %v399 = vshrl.u32 %v398, 7
    %v400 = vsub.s32 2, %v399
    %v401 = vrot.slane %v390, %v400
    %v402 = vlaneseq
    %v403 = vshrl.u32 %v402, 7
    %v404 = vsub.s32 2, %v403
    %v405 = vrot.slane %v391, %v404
    %v406 = vlaneseq
    %v407 = vshrl.u32 %v406, 7
    %v408 = vsub.s32 2, %v407
    %v409 = vrot.slane %v392, %v408
    %v410 = vlaneseq
    %v411 = vshrl.u32 %v410, 7
    %v412 = vsub.s32 2, %v411
    %v413 = vrot.slane %v393, %v412
    %v414 = vlaneseq
    %v415 = vshrl.u32 %v414, 7
    %v416 = vsub.s32 2, %v415
    %v417 = vrot.slane %v394, %v416
    %v418 = vlaneseq
    %v419 = vshrl.u32 %v418, 7
    %v420 = vsub.s32 2, %v419
    %v421 = vrot.slane %v395, %v420
    %v422 = vlaneseq
    %v423 = vshrl.u32 %v422, 7
    %v424 = vsub.s32 2, %v423
    %v425 = vrot.slane %v396, %v424
    %v426 = vlaneseq
    %v427 = vshrl.u32 %v426, 7
    %v428 = vsub.s32 2, %v427
    %v429 = vrot.slane %v397, %v428
    %v430 = vmul.f32 %v401, %v389
    %v431 = vmul.f32 %v405, %v389
    %v432 = vmul.f32 %v409, %v389
    %v433 = vmul.f32 %v413, %v389
    %v434 = vmul.f32 %v417, %v389
    %v435 = vmul.f32 %v421, %v389
    %v436 = vmul.f32 %v425, %v389
    %v437 = vmul.f32 %v429, %v389
    %v438 = vsub.f32 %v356, %v430
    %v439 = vsub.f32 %v357, %v431
    %v440 = vsub.f32 %v358, %v432
    %v441 = vsub.f32 %v359, %v433
    %v442 = vsub.f32 %v360, %v434
    %v443 = vsub.f32 %v361, %v435
    %v444 = vsub.f32 %v362, %v436
    %v445 = vsub.f32 %v363, %v437
    %v446 = vmul.f32 %v375, %v388
    %v447 = vmul.f32 %v401, %v446
    %v448 = vmul.f32 %v405, %v446
    %v449 = vmul.f32 %v409, %v446
    %v450 = vmul.f32 %v413, %v446
    %v451 = vmul.f32 %v417, %v446
    %v452 = vmul.f32 %v421, %v446
    %v453 = vmul.f32 %v425, %v446
    %v454 = vmul.f32 %v429, %v446
    %v455 = vsub.f32 %v373, %v447
    %v456 = vsub.f32 %v374, %v448
    %v457 = vsub.f32 %v375, %v449
    %v458 = vsub.f32 %v376, %v450
    %v459 = vsub.f32 %v377, %v451
    %v460 = vsub.f32 %v378, %v452
    %v461 = vsub.f32 %v379, %v453
    %v462 = vsub.f32 %v380, %v454
    %v463 = vrcp.pop %v458
    %v464 = vmul.f32 %v458, %v463
    %v465 = vsub.f32 2.0, %v464
    %v466 = vmul.f32 %v463, %v465
    %v467 = vlaneseq
    %v468 = vshrl.u32 %v467, 7
    %v469 = vsub.s32 3, %v468
    %v470 = vrot.slane %v466, %v469
    %v471 = vmul.f32 %v441, %v470
    %v472 = vsub.f32 %v455, %v180
    %v473 = vsub.f32 %v456, %v185
    %v474 = vsub.f32 %v457, %v190
    %v475 = vsub.f32 %v458, %v195
    %v476 = vsub.f32 %v459, %v200
    %v477 = vsub.f32 %v460, %v205
    %v478 = vsub.f32 %v461, %v210
    %v479 = vsub.f32 %v462, %v215
    %v480 = vlaneseq
    %v481 = vshrl.u32 %v480, 7
    %v482 = vsub.s32 3, %v481
    %v483 = vrot.slane %v472, %v482
    %v484 = vlaneseq
    %v485 = vshrl.u32 %v484, 7
    %v486 = vsub.s32 3, %v485
    %v487 = vrot.slane %v473, %v486
    %v488 = vlaneseq
    %v489 = vshrl.u32 %v488, 7
    %v490 = vsub.s32 3, %v489
    %v491 = vrot.slane %v474, %v490
    %v492 = vlaneseq
    %v493 = vshrl.u32 %v492, 7
    %v494 = vsub.s32 3, %v493
    %v495 = vrot.slane %v475, %v494
    %v496 = vlaneseq
    %v497 = vshrl.u32 %v496, 7
    %v498 = vsub.s32 3, %v497
    %v499 = vrot.slane %v476, %v498
    %v500 = vlaneseq
    %v501 = vshrl.u32 %v500, 7
    %v502 = vsub.s32 3, %v501
    %v503 = vrot.slane %v477, %v502
    %v504 = vlaneseq
    %v505 = vshrl.u32 %v504, 7
    %v506 = vsub.s32 3, %v505
    %v507 = vrot.slane %v478, %v506
    %v508 = vlaneseq
    %v509 = vshrl.u32 %v508, 7
    %v510 = vsub.s32 3, %v509
    %v511 = vrot.slane %v479, %v510
    %v512 = vmul.f32 %v483, %v471
    %v513 = vmul.f32 %v487, %v471
    %v514 = vmul.f32 %v491, %v471
    %v515 = vmul.f32 %v495, %v471
    %v516 = vmul.f32 %v499, %v471
    %v517 = vmul.f32 %v503, %v471
    %v518 = vmul.f32 %v507, %v471
    %v519 = vmul.f32 %v511, %v471
    %v520 = vsub.f32 %v438, %v512
    %v521 = vsub.f32 %v439, %v513
    %v522 = vsub.f32 %v440, %v514
    %v523 = vsub.f32 %v441, %v515
    %v524 = vsub.f32 %v442, %v516
    %v525 = vsub.f32 %v443, %v517
    %v526 = vsub.f32 %v444, %v518
    %v527 = vsub.f32 %v445, %v519
    %v528 = vmul.f32 %v458, %v470
    %v529 = vmul.f32 %v483, %v528
    %v530 = vmul.f32 %v487, %v528
    %v531 = vmul.f32 %v491, %v528
    %v532 = vmul.f32 %v495, %v528
    %v533 = vmul.f32 %v499, %v528
    %v534 = vmul.f32 %v503, %v528
    %v535 = vmul.f32 %v507, %v528
    %v536 = vmul.f32 %v511, %v528
    %v537 = vsub.f32 %v455, %v529
    %v538 = vsub.f32 %v456, %v530
    %v539 = vsub.f32 %v457, %v531
    %v540 = vsub.f32 %v458, %v532
    %v541 = vsub.f32 %v459, %v533
    %v542 = vsub.f32 %v460, %v534
    %v543 = vsub.f32 %v461, %v535
    %v544 = vsub.f32 %v462, %v536
    %v545 = vrcp.pop %v541
    %v546 = vmul.f32 %v541, %v545
    %v547 = vsub.f32 2.0, %v546
    %v548 = vmul.f32 %v545, %v547
    %v549 = vlaneseq
    %v550 = vshrl.u32 %v549, 7
    %v551 = vsub.s32 4, %v550
    %v552 = vrot.slane %v548, %v551
    %v553 = vmul.f32 %v524, %v552
    %v554 = vsub.f32 %v537, %v180
    %v555 = vsub.f32 %v538, %v185
    %v556 = vsub.f32 %v539, %v190
    %v557 = vsub.f32 %v540, %v195
    %v558 = vsub.f32 %v541, %v200
    %v559 = vsub.f32 %v542, %v205
    %v560 = vsub.f32 %v543, %v210
    %v561 = vsub.f32 %v544, %v215
    %v562 = vlaneseq
    %v563 = vshrl.u32 %v562, 7
    %v564 = vsub.s32 4, %v563
    %v565 = vrot.slane %v554, %v564
    %v566 = vlaneseq
    %v567 = vshrl.u32 %v566, 7
    %v568 = vsub.s32 4, %v567
    %v569 = vrot.slane %v555, %v568
    %v570 = vlaneseq
    %v571 = vshrl.u32 %v570, 7
    %v572 = vsub.s32 4, %v571
    %v573 = vrot.slane %v556, %v572
    %v574 = vlaneseq
    %v575 = vshrl.u32 %v574, 7
    %v576 = vsub.s32 4, %v575
    %v577 = vrot.slane %v557, %v576
    %v578 = vlaneseq
    %v579 = vshrl.u32 %v578, 7
    %v580 = vsub.s32 4, %v579
    %v581 = vrot.slane %v558, %v580
    %v582 = vlaneseq
    %v583 = vshrl.u32 %v582, 7
    %v584 = vsub.s32 4, %v583
    %v585 = vrot.slane %v559, %v584
    %v586 = vlaneseq
    %v587 = vshrl.u32 %v586, 7
    %v588 = vsub.s32 4, %v587
    %v589 = vrot.slane %v560, %v588
    %v590 = vlaneseq
    %v591 = vshrl.u32 %v590, 7
    %v592 = vsub.s32 4, %v591
    %v593 = vrot.slane %v561, %v592
    %v594 = vmul.f32 %v565, %v553
    %v595 = vmul.f32 %v569, %v553
    %v596 = vmul.f32 %v573, %v553
    %v597 = vmul.f32 %v577, %v553
    %v598 = vmul.f32 %v581, %v553
    %v599 = vmul.f32 %v585, %v553
    %v600 = vmul.f32 %v589, %v553
    %v601 = vmul.f32 %v593, %v553
    %v602 = vsub.f32 %v520, %v594
    %v603 = vsub.f32 %v521, %v595
    %v604 = vsub.f32 %v522, %v596
    %v605 = vsub.f32 %v523, %v597
    %v606 = vsub.f32 %v524, %v598
    %v607 = vsub.f32 %v525, %v599
    %v608 = vsub.f32 %v526, %v600
    %v609 = vsub.f32 %v527, %v601
    %v610 = vmul.f32 %v541, %v552
    %v611 = vmul.f32 %v565, %v610
    %v612 = vmul.f32 %v569, %v610
    %v613 = vmul.f32 %v573, %v610
    %v614 = vmul.f32 %v577, %v610
    %v615 = vmul.f32 %v581, %v610
    %v616 = vmul.f32 %v585, %v610
    %v617 = vmul.f32 %v589, %v610
    %v618 = vmul.f32 %v593, %v610
    %v619 = vsub.f32 %v537, %v611
    %v620 = vsub.f32 %v538, %v612
    %v621 = vsub.f32 %v539, %v613
    %v622 = vsub.f32 %v540, %v614
    %v623 = vsub.f32 %v541, %v615
    %v624 = vsub.f32 %v542, %v616
    %v625 = vsub.f32 %v543, %v617
    %v626 = vsub.f32 %v544, %v618
    %v627 = vrcp.pop %v624
    %v628 = vmul.f32 %v624, %v627
    %v629 = vsub.f32 2.0, %v628
    %v630 = vmul.f32 %v627, %v629
    %v631 = vlaneseq
    %v632 = vshrl.u32 %v631, 7
    %v633 = vsub.s32 5, %v632
    %v634 = vrot.slane %v630, %v633
    %v635 = vmul.f32 %v607, %v634
    %v636 = vsub.f32 %v619, %v180
    %v637 = vsub.f32 %v620, %v185
    %v638 = vsub.f32 %v621, %v190
    %v639 = vsub.f32 %v622, %v195
    %v640 = vsub.f32 %v623, %v200
    %v641 = vsub.f32 %v624, %v205
    %v642 = vsub.f32 %v625, %v210
    %v643 = vsub.f32 %v626, %v215
    %v644 = vlaneseq
    %v645 = vshrl.u32 %v644, 7
    %v646 = vsub.s32 5, %v645
    %v647 = vrot.slane %v636, %v646
    %v648 = vlaneseq
    %v649 = vshrl.u32 %v648, 7
    %v650 = vsub.s32 5, %v649
    %v651 = vrot.slane %v637, %v650
    %v652 = vlaneseq
    %v653 = vshrl.u32 %v652, 7
    %v654 = vsub.s32 5, %v653
    %v655 = vrot.slane %v638, %v654
    %v656 = vlaneseq
    %v657 = vshrl.u32 %v656, 7
    %v658 = vsub.s32 5, %v657
    %v659 = vrot.slane %v639, %v658
    %v660 = vlaneseq
    %v661 = vshrl.u32 %v660, 7
    %v662 = vsub.s32 5, %v661
    %v663 = vrot.slane %v640, %v662
    %v664 = vlaneseq
    %v665 = vshrl.u32 %v664, 7
    %v666 = vsub.s32 5, %v665
    %v667 = vrot.slane %v641, %v666
    %v668 = vlaneseq
    %v669 = vshrl.u32 %v668, 7
    %v670 = vsub.s32 5, %v669
    %v671 = vrot.slane %v642, %v670
    %v672 = vlaneseq
    %v673 = vshrl.u32 %v672, 7
    %v674 = vsub.s32 5, %v673
    %v675 = vrot.slane %v643, %v674
    %v676 = vmul.f32 %v647, %v635
    %v677 = vmul.f32 %v651, %v635
    %v678 = vmul.f32 %v655, %v635
    %v679 = vmul.f32 %v659, %v635
    %v680 = vmul.f32 %v663, %v635
    %v681 = vmul.f32 %v667, %v635
    %v682 = vmul.f32 %v671, %v635
    %v683 = vmul.f32 %v675, %v635
    %v684 = vsub.f32 %v602, %v676
    %v685 = vsub.f32 %v603, %v677
    %v686 = vsub.f32 %v604, %v678
    %v687 = vsub.f32 %v605, %v679
    %v688 = vsub.f32 %v606, %v680
    %v689 = vsub.f32 %v607, %v681
    %v690 = vsub.f32 %v608, %v682
    %v691 = vsub.f32 %v609, %v683
    %v692 = vmul.f32 %v624, %v634
    %v693 = vmul.f32 %v647, %v692
    %v694 = vmul.f32 %v651, %v692
    %v695 = vmul.f32 %v655, %v692
    %v696 = vmul.f32 %v659, %v692
    %v697 = vmul.f32 %v663, %v692
    %v698 = vmul.f32 %v667, %v692
    %v699 = vmul.f32 %v671, %v692
    %v700 = vmul.f32 %v675, %v692
    %v701 = vsub.f32 %v619, %v693
    %v702 = vsub.f32 %v620, %v694
    %v703 = vsub.f32 %v621, %v695
    %v704 = vsub.f32 %v622, %v696
    %v705 = vsub.f32 %v623, %v697
    %v706 = vsub.f32 %v624, %v698
    %v707 = vsub.f32 %v625, %v699
    %v708 = vsub.f32 %v626, %v700
    %v709 = vrcp.pop %v707
    %v710 = vmul.f32 %v707, %v709
    %v711 = vsub.f32 2.0, %v710
    %v712 = vmul.f32 %v709, %v711
    %v713 = vlaneseq
    %v714 = vshrl.u32 %v713, 7
    %v715 = vsub.s32 6, %v714
    %v716 = vrot.slane %v712, %v715
    %v717 = vmul.f32 %v690, %v716
    %v718 = vsub.f32 %v701, %v180
    %v719 = vsub.f32 %v702, %v185
    %v720 = vsub.f32 %v703, %v190
    %v721 = vsub.f32 %v704, %v195
    %v722 = vsub.f32 %v705, %v200
    %v723 = vsub.f32 %v706, %v205
    %v724 = vsub.f32 %v707, %v210
    %v725 = vsub.f32 %v708, %v215
    %v726 = vlaneseq
    %v727 = vshrl.u32 %v726, 7
    %v728 = vsub.s32 6, %v727
    %v729 = vrot.slane %v718, %v728
    %v730 = vlaneseq
    %v731 = vshrl.u32 %v730, 7
    %v732 = vsub.s32 6, %v731
    %v733 = vrot.slane %v719, %v732
    %v734 = vlaneseq
    %v735 = vshrl.u32 %v734, 7
    %v736 = vsub.s32 6, %v735
    %v737 = vrot.slane %v720, %v736
    %v738 = vlaneseq
    %v739 = vshrl.u32 %v738, 7
    %v740 = vsub.s32 6, %v739
    %v741 = vrot.slane %v721, %v740
    %v742 = vlaneseq
    %v743 = vshrl.u32 %v742, 7
    %v744 = vsub.s32 6, %v743
    %v745 = vrot.slane %v722, %v744
    %v746 = vlaneseq
    %v747 = vshrl.u32 %v746, 7
    %v748 = vsub.s32 6, %v747
    %v749 = vrot.slane %v723, %v748
    %v750 = vlaneseq
    %v751 = vshrl.u32 %v750, 7
    %v752 = vsub.s32 6, %v751
    %v753 = vrot.slane %v724, %v752
    %v754 = vlaneseq
    %v755 = vshrl.u32 %v754, 7
    %v756 = vsub.s32 6, %v755
    %v757 = vrot.slane %v725, %v756
    %v758 = vmul.f32 %v729, %v717
    %v759 = vmul.f32 %v733, %v717
    %v760 = vmul.f32 %v737, %v717
    %v761 = vmul.f32 %v741, %v717
    %v762 = vmul.f32 %v745, %v717
    %v763 = vmul.f32 %v749, %v717
    %v764 = vmul.f32 %v753, %v717
    %v765 = vmul.f32 %v757, %v717
    %v766 = vsub.f32 %v684, %v758
    %v767 = vsub.f32 %v685, %v759
    %v768 = vsub.f32 %v686, %v760
    %v769 = vsub.f32 %v687, %v761
    %v770 = vsub.f32 %v688, %v762
    %v771 = vsub.f32 %v689, %v763
    %v772 = vsub.f32 %v690, %v764
    %v773 = vsub.f32 %v691, %v765
    %v774 = vmul.f32 %v707, %v716
    %v775 = vmul.f32 %v729, %v774
    %v776 = vmul.f32 %v733, %v774
    %v777 = vmul.f32 %v737, %v774
    %v778 = vmul.f32 %v741, %v774
    %v779 = vmul.f32 %v745, %v774
    %v780 = vmul.f32 %v749, %v774
    %v781 = vmul.f32 %v753, %v774
    %v782 = vmul.f32 %v757, %v774
    %v783 = vsub.f32 %v701, %v775
    %v784 = vsub.f32 %v702, %v776
    %v785 = vsub.f32 %v703, %v777
    %v786 = vsub.f32 %v704, %v778
    %v787 = vsub.f32 %v705, %v779
    %v788 = vsub.f32 %v706, %v780
    %v789 = vsub.f32 %v707, %v781
    %v790 = vsub.f32 %v708, %v782
    %v791 = vrcp.pop %v790
    %v792 = vmul.f32 %v790, %v791
    %v793 = vsub.f32 2.0, %v792
    %v794 = vmul.f32 %v791, %v793
    %v795 = vlaneseq
    %v796 = vshrl.u32 %v795, 7
    %v797 = vsub.s32 7, %v796
    %v798 = vrot.slane %v794, %v797
    %v799 = vmul.f32 %v773, %v798
    %v800 = vsub.f32 %v783, %v180
    %v801 = vsub.f32 %v784, %v185
    %v802 = vsub.f32 %v785, %v190
    %v803 = vsub.f32 %v786, %v195
    %v804 = vsub.f32 %v787, %v200
    %v805 = vsub.f32 %v788, %v205
    %v806 = vsub.f32 %v789, %v210
    %v807 = vsub.f32 %v790, %v215
    %v808 = vlaneseq
    %v809 = vshrl.u32 %v808, 7
    %v810 = vsub.s32 7, %v809
    %v811 = vrot.slane %v800, %v810
    %v812 = vlaneseq
    %v813 = vshrl.u32 %v812, 7
    %v814 = vsub.s32 7, %v813
    %v815 = vrot.slane %v801, %v814
    %v816 = vlaneseq
    %v817 = vshrl.u32 %v816, 7
    %v818 = vsub.s32 7, %v817
    %v819 = vrot.slane %v802, %v818
    %v820 = vlaneseq
    %v821 = vshrl.u32 %v820, 7
    %v822 = vsub.s32 7, %v821
    %v823 = vrot.slane %v803, %v822
    %v824 = vlaneseq
    %v825 = vshrl.u32 %v824, 7
    %v826 = vsub.s32 7, %v825
    %v827 = vrot.slane %v804, %v826
    %v828 = vlaneseq
    %v829 = vshrl.u32 %v828, 7
    %v830 = vsub.s32 7, %v829
    %v831 = vrot.slane %v805, %v830
    %v832 = vlaneseq
    %v833 = vshrl.u32 %v832, 7
    %v834 = vsub.s32 7, %v833
    %v835 = vrot.slane %v806, %v834
    %v836 = vlaneseq
    %v837 = vshrl.u32 %v836, 7
    %v838 = vsub.s32 7, %v837
    %v839 = vrot.slane %v807, %v838
    %v840 = vmul.f32 %v811, %v799
    %v841 = vmul.f32 %v815, %v799
    %v842 = vmul.f32 %v819, %v799
    %v843 = vmul.f32 %v823, %v799
    %v844 = vmul.f32 %v827, %v799
    %v845 = vmul.f32 %v831, %v799
    %v846 = vmul.f32 %v835, %v799
    %v847 = vmul.f32 %v839, %v799
    %v848 = vsub.f32 %v766, %v840
    %v849 = vsub.f32 %v767, %v841
    %v850 = vsub.f32 %v768, %v842
    %v851 = vsub.f32 %v769, %v843
    %v852 = vsub.f32 %v770, %v844
    %v853 = vsub.f32 %v771, %v845
    %v854 = vsub.f32 %v772, %v846
    %v855 = vsub.f32 %v773, %v847
    %vm856 = vcmask 1040384
    %v857 = vsel %vm856, %v169, %v292
    %vm858 = vcmask 1041408
    %v859 = vsel %vm858, %v857, %v375
    %vm860 = vcmask 1042432
    %v861 = vsel %vm860, %v859, %v458
    %vm862 = vcmask 1043456
    %v863 = vsel %vm862, %v861, %v541
    %vm864 = vcmask 1044480
    %v865 = vsel %vm864, %v863, %v624
    %vm866 = vcmask 1045504
    %v867 = vsel %vm866, %v865, %v707
    %vm868 = vcmask 1046528
    %v869 = vsel %vm868, %v867, %v790
    %v870 = vlog2.pop %v869
    %v871 = vmul.f32 %v870, 0.6931472
    %v872 = vrot.slane %v871, 4
    %v873 = vadd.f32 %v871, %v872
    %v874 = vrot.slane %v873, 2
    %v875 = vadd.f32 %v873, %v874
    %v876 = vrot.slane %v875, 1
    %v877 = vadd.f32 %v875, %v876
    %v878 = vrcp.pop %v161
    %v879 = vmul.f32 %v161, %v878
    %v880 = vsub.f32 2.0, %v879
    %v881 = vmul.f32 %v878, %v880
    %v882 = vlaneseq
    %v883 = vshrl.u32 %v882, 7
    %v884 = vsub.s32 0, %v883
    %v885 = vrot.slane %v881, %v884
    %v886 = vmul.f32 %v161, %v885
    %v887 = vlaneseq
    %v888 = vshrl.u32 %v887, 7
    %v889 = vsub.s32 0, %v888
    %v890 = vrot.slane %v162, %v889
    %v891 = vlaneseq
    %v892 = vshrl.u32 %v891, 7
    %v893 = vsub.s32 0, %v892
    %v894 = vrot.slane %v163, %v893
    %v895 = vlaneseq
    %v896 = vshrl.u32 %v895, 7
    %v897 = vsub.s32 0, %v896
    %v898 = vrot.slane %v164, %v897
    %v899 = vlaneseq
    %v900 = vshrl.u32 %v899, 7
    %v901 = vsub.s32 0, %v900
    %v902 = vrot.slane %v165, %v901
    %v903 = vlaneseq
    %v904 = vshrl.u32 %v903, 7
    %v905 = vsub.s32 0, %v904
    %v906 = vrot.slane %v166, %v905
    %v907 = vlaneseq
    %v908 = vshrl.u32 %v907, 7
    %v909 = vsub.s32 0, %v908
    %v910 = vrot.slane %v167, %v909
    %v911 = vlaneseq
    %v912 = vshrl.u32 %v911, 7
    %v913 = vsub.s32 0, %v912
    %v914 = vrot.slane %v168, %v913
    %v915 = vmul.f32 %v890, %v886
    %v916 = vmul.f32 %v894, %v886
    %v917 = vmul.f32 %v898, %v886
    %v918 = vmul.f32 %v902, %v886
    %v919 = vmul.f32 %v906, %v886
    %v920 = vmul.f32 %v910, %v886
    %v921 = vmul.f32 %v914, %v886
    %v922 = vsub.f32 %v162, %v915
    %v923 = vsub.f32 %v163, %v916
    %v924 = vsub.f32 %v164, %v917
    %v925 = vsub.f32 %v165, %v918
    %v926 = vsub.f32 %v166, %v919
    %v927 = vsub.f32 %v167, %v920
    %v928 = vsub.f32 %v168, %v921
    %v929 = vrcp.pop %v922
    %v930 = vmul.f32 %v922, %v929
    %v931 = vsub.f32 2.0, %v930
    %v932 = vmul.f32 %v929, %v931
    %v933 = vlaneseq
    %v934 = vshrl.u32 %v933, 7
    %v935 = vsub.s32 1, %v934
    %v936 = vrot.slane %v932, %v935
    %v937 = vmul.f32 %v922, %v936
    %v938 = vlaneseq
    %v939 = vshrl.u32 %v938, 7
    %v940 = vsub.s32 1, %v939
    %v941 = vrot.slane %v923, %v940
    %v942 = vlaneseq
    %v943 = vshrl.u32 %v942, 7
    %v944 = vsub.s32 1, %v943
    %v945 = vrot.slane %v924, %v944
    %v946 = vlaneseq
    %v947 = vshrl.u32 %v946, 7
    %v948 = vsub.s32 1, %v947
    %v949 = vrot.slane %v925, %v948
    %v950 = vlaneseq
    %v951 = vshrl.u32 %v950, 7
    %v952 = vsub.s32 1, %v951
    %v953 = vrot.slane %v926, %v952
    %v954 = vlaneseq
    %v955 = vshrl.u32 %v954, 7
    %v956 = vsub.s32 1, %v955
    %v957 = vrot.slane %v927, %v956
    %v958 = vlaneseq
    %v959 = vshrl.u32 %v958, 7
    %v960 = vsub.s32 1, %v959
    %v961 = vrot.slane %v928, %v960
    %v962 = vmul.f32 %v941, %v937
    %v963 = vmul.f32 %v945, %v937
    %v964 = vmul.f32 %v949, %v937
    %v965 = vmul.f32 %v953, %v937
    %v966 = vmul.f32 %v957, %v937
    %v967 = vmul.f32 %v961, %v937
    %v968 = vsub.f32 %v923, %v962
    %v969 = vsub.f32 %v924, %v963
    %v970 = vsub.f32 %v925, %v964
    %v971 = vsub.f32 %v926, %v965
    %v972 = vsub.f32 %v927, %v966
    %v973 = vsub.f32 %v928, %v967
    %v974 = vrcp.pop %v968
    %v975 = vmul.f32 %v968, %v974
    %v976 = vsub.f32 2.0, %v975
    %v977 = vmul.f32 %v974, %v976
    %v978 = vlaneseq
    %v979 = vshrl.u32 %v978, 7
    %v980 = vsub.s32 2, %v979
    %v981 = vrot.slane %v977, %v980
    %v982 = vmul.f32 %v968, %v981
    %v983 = vlaneseq
    %v984 = vshrl.u32 %v983, 7
    %v985 = vsub.s32 2, %v984
    %v986 = vrot.slane %v969, %v985
    %v987 = vlaneseq
    %v988 = vshrl.u32 %v987, 7
    %v989 = vsub.s32 2, %v988
    %v990 = vrot.slane %v970, %v989
    %v991 = vlaneseq
    %v992 = vshrl.u32 %v991, 7
    %v993 = vsub.s32 2, %v992
    %v994 = vrot.slane %v971, %v993
    %v995 = vlaneseq
    %v996 = vshrl.u32 %v995, 7
    %v997 = vsub.s32 2, %v996
    %v998 = vrot.slane %v972, %v997
    %v999 = vlaneseq
    %v1000 = vshrl.u32 %v999, 7
    %v1001 = vsub.s32 2, %v1000
    %v1002 = vrot.slane %v973, %v1001
    %v1003 = vmul.f32 %v986, %v982
    %v1004 = vmul.f32 %v990, %v982
    %v1005 = vmul.f32 %v994, %v982
    %v1006 = vmul.f32 %v998, %v982
    %v1007 = vmul.f32 %v1002, %v982
    %v1008 = vsub.f32 %v969, %v1003
    %v1009 = vsub.f32 %v970, %v1004
    %v1010 = vsub.f32 %v971, %v1005
    %v1011 = vsub.f32 %v972, %v1006
    %v1012 = vsub.f32 %v973, %v1007
    %v1013 = vrcp.pop %v1008
    %v1014 = vmul.f32 %v1008, %v1013
    %v1015 = vsub.f32 2.0, %v1014
    %v1016 = vmul.f32 %v1013, %v1015
    %v1017 = vlaneseq
    %v1018 = vshrl.u32 %v1017, 7
    %v1019 = vsub.s32 3, %v1018
    %v1020 = vrot.slane %v1016, %v1019
    %v1021 = vmul.f32 %v1008, %v1020
    %v1022 = vlaneseq
    %v1023 = vshrl.u32 %v1022, 7
    %v1024 = vsub.s32 3, %v1023
    %v1025 = vrot.slane %v1009, %v1024
    %v1026 = vlaneseq
    %v1027 = vshrl.u32 %v1026, 7
    %v1028 = vsub.s32 3, %v1027
    %v1029 = vrot.slane %v1010, %v1028
    %v1030 = vlaneseq
    %v1031 = vshrl.u32 %v1030, 7
    %v1032 = vsub.s32 3, %v1031
    %v1033 = vrot.slane %v1011, %v1032
    %v1034 = vlaneseq
    %v1035 = vshrl.u32 %v1034, 7
    %v1036 = vsub.s32 3, %v1035
    %v1037 = vrot.slane %v1012, %v1036
    %v1038 = vmul.f32 %v1025, %v1021
    %v1039 = vmul.f32 %v1029, %v1021
    %v1040 = vmul.f32 %v1033, %v1021
    %v1041 = vmul.f32 %v1037, %v1021
    %v1042 = vsub.f32 %v1009, %v1038
    %v1043 = vsub.f32 %v1010, %v1039
    %v1044 = vsub.f32 %v1011, %v1040
    %v1045 = vsub.f32 %v1012, %v1041
    %v1046 = vrcp.pop %v1042
    %v1047 = vmul.f32 %v1042, %v1046
    %v1048 = vsub.f32 2.0, %v1047
    %v1049 = vmul.f32 %v1046, %v1048
    %v1050 = vlaneseq
    %v1051 = vshrl.u32 %v1050, 7
    %v1052 = vsub.s32 4, %v1051
    %v1053 = vrot.slane %v1049, %v1052
    %v1054 = vmul.f32 %v1042, %v1053
    %v1055 = vlaneseq
    %v1056 = vshrl.u32 %v1055, 7
    %v1057 = vsub.s32 4, %v1056
    %v1058 = vrot.slane %v1043, %v1057
    %v1059 = vlaneseq
    %v1060 = vshrl.u32 %v1059, 7
    %v1061 = vsub.s32 4, %v1060
    %v1062 = vrot.slane %v1044, %v1061
    %v1063 = vlaneseq
    %v1064 = vshrl.u32 %v1063, 7
    %v1065 = vsub.s32 4, %v1064
    %v1066 = vrot.slane %v1045, %v1065
    %v1067 = vmul.f32 %v1058, %v1054
    %v1068 = vmul.f32 %v1062, %v1054
    %v1069 = vmul.f32 %v1066, %v1054
    %v1070 = vsub.f32 %v1043, %v1067
    %v1071 = vsub.f32 %v1044, %v1068
    %v1072 = vsub.f32 %v1045, %v1069
    %v1073 = vrcp.pop %v1070
    %v1074 = vmul.f32 %v1070, %v1073
    %v1075 = vsub.f32 2.0, %v1074
    %v1076 = vmul.f32 %v1073, %v1075
    %v1077 = vlaneseq
    %v1078 = vshrl.u32 %v1077, 7
    %v1079 = vsub.s32 5, %v1078
    %v1080 = vrot.slane %v1076, %v1079
    %v1081 = vmul.f32 %v1070, %v1080
    %v1082 = vlaneseq
    %v1083 = vshrl.u32 %v1082, 7
    %v1084 = vsub.s32 5, %v1083
    %v1085 = vrot.slane %v1071, %v1084
    %v1086 = vlaneseq
    %v1087 = vshrl.u32 %v1086, 7
    %v1088 = vsub.s32 5, %v1087
    %v1089 = vrot.slane %v1072, %v1088
    %v1090 = vmul.f32 %v1085, %v1081
    %v1091 = vmul.f32 %v1089, %v1081
    %v1092 = vsub.f32 %v1071, %v1090
    %v1093 = vsub.f32 %v1072, %v1091
    %v1094 = vrcp.pop %v1092
    %v1095 = vmul.f32 %v1092, %v1094
    %v1096 = vsub.f32 2.0, %v1095
    %v1097 = vmul.f32 %v1094, %v1096
    %v1098 = vlaneseq
    %v1099 = vshrl.u32 %v1098, 7
    %v1100 = vsub.s32 6, %v1099
    %v1101 = vrot.slane %v1097, %v1100
    %v1102 = vmul.f32 %v1092, %v1101
    %v1103 = vlaneseq
    %v1104 = vshrl.u32 %v1103, 7
    %v1105 = vsub.s32 6, %v1104
    %v1106 = vrot.slane %v1093, %v1105
    %v1107 = vmul.f32 %v1106, %v1102
    %v1108 = vsub.f32 %v1093, %v1107
    %v1109 = vsel %vm856, %v161, %v922
    %v1110 = vsel %vm858, %v1109, %v968
    %v1111 = vsel %vm860, %v1110, %v1008
    %v1112 = vsel %vm862, %v1111, %v1042
    %v1113 = vsel %vm864, %v1112, %v1070
    %v1114 = vsel %vm866, %v1113, %v1092
    %v1115 = vsel %vm868, %v1114, %v1108
    %v1116 = vlog2.pop %v1115
    %v1117 = vmul.f32 %v1116, 0.6931472
    %v1118 = vrot.slane %v1117, 4
    %v1119 = vadd.f32 %v1117, %v1118
    %v1120 = vrot.slane %v1119, 2
    %v1121 = vadd.f32 %v1119, %v1120
    %v1122 = vrot.slane %v1121, 1
    %v1123 = vadd.f32 %v1121, %v1122
    %v1124 = vsub.f32 %v70, %v69
    %v1126 = vcombine.high %v1124, %v1124
    %v1128 = vunpack.c.l.s4 1966171168
    %v1129 = vunpack.c.0.s8 %v1128
    %v1130 = vlaneseq
    %v1131 = vshrl.u32 %v1130, 7
    %v1132 = vsub.s32 %v1129, %v1131
    %v1133 = vrot.slane %v1124, %v1132
    %v1135 = vunpack.c.l.s4 1966171168
    %v1136 = vunpack.c.0.s8 %v1135
    %v1137 = vlaneseq
    %v1138 = vshrl.u32 %v1137, 7
    %v1139 = vsub.s32 %v1136, %v1138
    %v1140 = vrot.slane %v1126, %v1139
    %v1141 = vcombine.high %v1133, %v1133
    %v1142 = vcombine.high %v1140, %v1140
    %v1144 = vunpack.c.l.s4 1966171168
    %v1145 = vunpack.c.0.s8 %v1144
    %v1146 = vlaneseq
    %v1147 = vshrl.u32 %v1146, 7
    %v1148 = vsub.s32 %v1145, %v1147
    %v1149 = vrot.slane %v1133, %v1148
    %v1151 = vunpack.c.l.s4 1966171168
    %v1152 = vunpack.c.0.s8 %v1151
    %v1153 = vlaneseq
    %v1154 = vshrl.u32 %v1153, 7
    %v1155 = vsub.s32 %v1152, %v1154
    %v1156 = vrot.slane %v1140, %v1155
    %v1158 = vunpack.c.l.s4 1966171168
    %v1159 = vunpack.c.0.s8 %v1158
    %v1160 = vlaneseq
    %v1161 = vshrl.u32 %v1160, 7
    %v1162 = vsub.s32 %v1159, %v1161
    %v1163 = vrot.slane %v1141, %v1162
    %v1165 = vunpack.c.l.s4 1966171168
    %v1166 = vunpack.c.0.s8 %v1165
    %v1167 = vlaneseq
    %v1168 = vshrl.u32 %v1167, 7
    %v1169 = vsub.s32 %v1166, %v1168
    %v1170 = vrot.slane %v1142, %v1169
    %v1171 = vcombine.high %v1149, %v1149
    %v1172 = vcombine.high %v1156, %v1156
    %v1173 = vcombine.high %v1163, %v1163
    %v1174 = vcombine.high %v1170, %v1170
    %v1175 = vlaneseq
    %v1176 = vshrl.u32 %v1175, 7
    %v1177 = vsub.s32 0, %v1176
    %v1178 = vrot.slane %v1149, %v1177
    %v1179 = vlaneseq
    %v1180 = vshrl.u32 %v1179, 7
    %v1181 = vsub.s32 0, %v1180
    %v1182 = vrot.slane %v1163, %v1181
    %v1183 = vlaneseq
    %v1184 = vshrl.u32 %v1183, 7
    %v1185 = vsub.s32 0, %v1184
    %v1186 = vrot.slane %v1171, %v1185
    %v1187 = vlaneseq
    %v1188 = vshrl.u32 %v1187, 7
    %v1189 = vsub.s32 0, %v1188
    %v1190 = vrot.slane %v1173, %v1189
    %v1191 = vlaneseq
    %v1192 = vshrl.u32 %v1191, 7
    %v1193 = vsub.s32 0, %v1192
    %v1194 = vrot.slane %v1156, %v1193
    %v1195 = vlaneseq
    %v1196 = vshrl.u32 %v1195, 7
    %v1197 = vsub.s32 0, %v1196
    %v1198 = vrot.slane %v1170, %v1197
    %v1199 = vlaneseq
    %v1200 = vshrl.u32 %v1199, 7
    %v1201 = vsub.s32 0, %v1200
    %v1202 = vrot.slane %v1172, %v1201
    %v1203 = vlaneseq
    %v1204 = vshrl.u32 %v1203, 7
    %v1205 = vsub.s32 0, %v1204
    %v1206 = vrot.slane %v1174, %v1205
    %v1215 = vmul.f32 %v1178, %v1124
    %v1216 = vmul.f32 %v1182, %v1124
    %v1217 = vmul.f32 %v1186, %v1124
    %v1218 = vmul.f32 %v1190, %v1124
    %v1219 = vmul.f32 %v1194, %v1124
    %v1220 = vmul.f32 %v1198, %v1124
    %v1221 = vmul.f32 %v1202, %v1124
    %v1222 = vmul.f32 %v1206, %v1124
    %v1223 = vadd.f32 %v161, %v1215
    %v1224 = vadd.f32 %v162, %v1216
    %v1225 = vadd.f32 %v163, %v1217
    %v1226 = vadd.f32 %v164, %v1218
    %v1227 = vadd.f32 %v165, %v1219
    %v1228 = vadd.f32 %v166, %v1220
    %v1229 = vadd.f32 %v167, %v1221
    %v1230 = vadd.f32 %v168, %v1222
    %v1231 = vmul.f32 %v848, %v1223
    %v1232 = vmul.f32 %v849, %v1224
    %v1233 = vmul.f32 %v850, %v1225
    %v1234 = vmul.f32 %v851, %v1226
    %v1235 = vmul.f32 %v852, %v1227
    %v1236 = vmul.f32 %v853, %v1228
    %v1237 = vmul.f32 %v854, %v1229
    %v1238 = vmul.f32 %v855, %v1230
    %v1239 = vadd.f32 %v1231, %v1232
    %v1240 = vadd.f32 %v1239, %v1233
    %v1241 = vadd.f32 %v1240, %v1234
    %v1242 = vadd.f32 %v1241, %v1235
    %v1243 = vadd.f32 %v1242, %v1236
    %v1244 = vadd.f32 %v1243, %v1237
    %v1245 = vadd.f32 %v1244, %v1238
    %v1246 = vrot.slane %v1245, 4
    %v1247 = vadd.f32 %v1245, %v1246
    %v1248 = vrot.slane %v1247, 2
    %v1249 = vadd.f32 %v1247, %v1248
    %v1250 = vrot.slane %v1249, 1
    %v1251 = vadd.f32 %v1249, %v1250
    %v1252 = vadd.f32 %v1251, %v877
    %v1253 = vsub.f32 %v1252, %v1123
    %v1254 = vsub.f32 %v1253, 8.0
    %v1255 = vmul.f32 %v1254, 0.5
    %1256 = vst [vmem:[#allocation10] sm:$0x1] %v1255
    // Predicated region
    $region34: #{tpu_custom_call.1} parent=1 // pred_check
      _
    $region35: #{tpu_custom_call.1} parent=1 // pred_check_branch
      %1258 = sbr.rel (0) target = $region37
    $region36: #{tpu_custom_call.1} parent=1 // pred_region
      %s1260 = ssub.s32 16, 16
      %1261 = vsyncadd [#allocation4], %s1260
      %s1263 = sshll.u32 [#allocation10], 4
      %s1264 = int_to_ptr.vmem [resolvable:$true] %s1263
      %1266 = dma.vmem_to_hbm [thread:$0]  %s1264, 16, %s4, [#allocation4]
    $region37: #{tpu_custom_call.1} parent=1 // pred_fallthru
      _
    // Predicated region
    $region38: #{tpu_custom_call.1} parent=1 // pred_check
      _
    $region39: #{tpu_custom_call.1} parent=1 // pred_check_branch
      %1268 = sbr.rel (0) target = $region41
    $region40: #{tpu_custom_call.1} parent=1 // pred_region
      %1269 = dma.done [#allocation4], 16
    $region41: #{tpu_custom_call.1} parent=1 // pred_fallthru
      _
    %1270 = vsyncpa [#allocation3], 1
    %1271 = vsyncpa [#allocation6], 1
    %1272 = vsyncpa [#allocation9], 1
    %1273 = vsyncpa [#allocation4], 1

</llo_original>
